<compile_context>
chip_gen: v7x
topology: tpu7x:2x2x1
jax: 0.10.0
libtpu: 0.0.40
codegen_flags: <defaults>
</compile_context>

<pallas_src>
import functools

import jax
import jax.numpy as jnp
from jax import lax
from jax.experimental import pallas as pl
from jax.experimental.pallas import tpu as pltpu


@functools.partial(jax.jit, static_argnames=("t_chunk", "matmul_dtype"))
def toxic_text_classifier_forward(tokens, params, *, t_chunk=128,
                                  matmul_dtype=jnp.bfloat16):
    """tokens: (B, T) int32. Returns logits (B, O) float32."""
    emb_table = params["embedding"]               # (V, E)
    w_ih, w_hh = params["w_ih"], params["w_hh"]   # (4, H, E), (4, H, H) order [i,f,g,o]
    b_ih, b_hh = params["b_ih"], params["b_hh"]   # (4, H)
    w_fc, b_fc = params["w_fc"], params["b_fc"]   # (O, H), (O,)

    B, T = tokens.shape
    E = emb_table.shape[1]
    H = w_hh.shape[-1]
    O = w_fc.shape[0]
    GH = 4 * H
    cd = matmul_dtype
    cd_size = jnp.dtype(cd).itemsize

    # ---- batch tiling: pad to sublane multiple, block for the parallel axis ----
    Bb = max(8, min(((B + 7) // 8) * 8, 256))     # batch block (multiple of 8)
    n_b = -(-B // Bb)
    Bp = n_b * Bb

    # ---- time chunking: large chunks, capped by a VMEM budget; pad T up ----
    tc = max(1, min(int(t_chunk), T))

    def _chunk_vmem(tc_):
        # xp scratch (f32) + double-buffered streamed embedding block
        return tc_ * Bb * GH * 4 + 2 * tc_ * Bb * E * cd_size

    while tc > 8 and _chunk_vmem(tc) > (12 << 20):
        tc = max(8, (tc + 1) // 2)
    T_pad = -(-T // tc) * tc
    n_chunks = T_pad // tc
    need_mask = (T_pad != T)

    # ---- fused weights, gate order reordered [i, f, g, o] -> [i, f, o, g] ----
    perm = jnp.array([0, 1, 3, 2])
    wih_k = jnp.transpose(w_ih[perm], (2, 0, 1)).reshape(E, GH).astype(cd)   # (E, 4H)
    whh_k = jnp.transpose(w_hh[perm], (2, 0, 1)).reshape(H, GH).astype(cd)   # (H, 4H)
    bias_k = (b_ih + b_hh)[perm].reshape(1, GH).astype(jnp.float32)          # (1, 4H)
    wfc_k = jnp.transpose(w_fc, (1, 0)).astype(cd)                           # (H, O)
    bfc_k = b_fc[None, :].astype(jnp.float32)                                # (1, O)

    # ---- embedding gather + layout (n_b, T_pad*Bb, E), time-major per block ----
    emb = jnp.take(emb_table, tokens, axis=0)                 # (B, T, E)
    emb_tm = jnp.transpose(emb, (1, 0, 2))                    # (T, B, E)
    emb_tm = jnp.pad(emb_tm, ((0, T_pad - T), (0, Bp - B), (0, 0)))
    emb_k = (emb_tm.reshape(T_pad, n_b, Bb, E)
             .transpose(1, 0, 2, 3)
             .reshape(n_b, T_pad * Bb, E)
             .astype(cd))

    def kernel(emb_ref, wih_ref, whh_ref, bias_ref, wfc_ref, bfc_ref,
               out_ref, xp_scr, h_scr, c_scr):
        t = pl.program_id(1)
        last_t = pl.num_programs(1) - 1

        @pl.when(t == 0)
        def _init():
            h_scr[...] = jnp.zeros_like(h_scr)
            c_scr[...] = jnp.zeros_like(c_scr)

        # Hoisted input projection for the whole chunk (one big MXU matmul,
        # off the per-step critical path). Row i*Bb+j = timestep t*tc+i, batch j.
        xp_scr[...] = (jnp.dot(emb_ref[0], wih_ref[...],
                               preferred_element_type=jnp.float32)
                       + bias_ref[...])

        t0 = t * tc

        def step(i, carry):
            h, c = carry
            row = pl.multiple_of(i * Bb, 8)
            gates = xp_scr[pl.ds(row, Bb), :] + jnp.dot(
                h.astype(whh_ref.dtype), whh_ref[...],
                preferred_element_type=jnp.float32)                 # (Bb, 4H)
            sig = jax.nn.sigmoid(gates[:, :3 * H])                  # [i | f | o]
            i_g = sig[:, 0 * H:1 * H]
            f_g = sig[:, 1 * H:2 * H]
            o_g = sig[:, 2 * H:3 * H]
            g_g = jnp.tanh(gates[:, 3 * H:4 * H])
            c_new = f_g * c + i_g * g_g
            h_new = o_g * jnp.tanh(c_new)
            if need_mask:                      # static: only compiled when T padded
                valid = (t0 + i) < T
                h_new = jnp.where(valid, h_new, h)
                c_new = jnp.where(valid, c_new, c)
            return h_new, c_new

        # h/c carried in vregs across the chunk; scratch only at chunk boundaries.
        h_last, c_last = lax.fori_loop(0, tc, step, (h_scr[...], c_scr[...]),
                                       unroll=min(8, tc))
        h_scr[...] = h_last
        c_scr[...] = c_last

        @pl.when(t == last_t)
        def _finalize():
            out_ref[...] = (jnp.dot(h_last.astype(wfc_ref.dtype), wfc_ref[...],
                                    preferred_element_type=jnp.float32)
                            + bfc_ref[...]).astype(out_ref.dtype)

    chunk_bytes = _chunk_vmem(tc)
    weight_bytes = (E * GH + H * GH + H * O) * cd_size + (GH + O) * 4
    vmem_limit = int(min(max(2 * chunk_bytes + weight_bytes + (8 << 20), 24 << 20),
                         48 << 20))

    cost = pl.CostEstimate(
        flops=Bp * T_pad * (2 * E * GH + 2 * H * GH) + 2 * Bp * H * O,
        transcendentals=5 * T_pad * Bp * H,
        bytes_accessed=(T_pad * Bp * E * cd_size
                        + (E * GH + H * GH + H * O) * cd_size
                        + (GH + O) * 4 + Bp * O * 4),
    )

    logits_p = pl.pallas_call(
        kernel,
        out_shape=jax.ShapeDtypeStruct((Bp, O), jnp.float32),
        grid_spec=pltpu.PrefetchScalarGridSpec(
            num_scalar_prefetch=0,
            grid=(n_b, n_chunks),
            in_specs=[
                # streamed per-chunk embedding block (auto double-buffered)
                pl.BlockSpec((1, tc * Bb, E), lambda b, t: (b, t, 0)),
                # weights / biases: same block every step -> fetched once, resident
                pl.BlockSpec((E, GH), lambda b, t: (0, 0)),
                pl.BlockSpec((H, GH), lambda b, t: (0, 0)),
                pl.BlockSpec((1, GH), lambda b, t: (0, 0)),
                pl.BlockSpec((H, O), lambda b, t: (0, 0)),
                pl.BlockSpec((1, O), lambda b, t: (0, 0)),
            ],
            out_specs=pl.BlockSpec((Bb, O), lambda b, t: (b, 0)),
            scratch_shapes=[
                pltpu.VMEM((tc * Bb, GH), jnp.float32),   # per-chunk x projection
                pltpu.VMEM((Bb, H), jnp.float32),         # h state across chunks
                pltpu.VMEM((Bb, H), jnp.float32),         # c state across chunks
            ],
        ),
        compiler_params=pltpu.CompilerParams(
            dimension_semantics=("parallel", "arbitrary"),
            vmem_limit_bytes=vmem_limit),
        cost_estimate=cost,
    )(emb_k, wih_k, whh_k, bias_k, wfc_k, bfc_k)

    return logits_p[:B]


def reference_forward(tokens, params):
    """Pure-JAX reference replicating the PyTorch semantics."""
    emb_table = params["embedding"]
    w_ih, w_hh = params["w_ih"], params["w_hh"]
    b_ih, b_hh = params["b_ih"], params["b_hh"]
    w_fc, b_fc = params["w_fc"], params["b_fc"]

    B, T = tokens.shape
    H = w_hh.shape[-1]
    x = jnp.take(emb_table, tokens, axis=0)  # (B, T, E)

    def step(carry, x_t):
        h, c = carry
        gates = [
            x_t @ w_ih[g].T + b_ih[g] + h @ w_hh[g].T + b_hh[g] for g in range(4)
        ]
        i = jax.nn.sigmoid(gates[0])
        f = jax.nn.sigmoid(gates[1])
        g = jnp.tanh(gates[2])
        o = jax.nn.sigmoid(gates[3])
        c_new = f * c + i * g
        h_new = o * jnp.tanh(c_new)
        return (h_new, c_new), None

    h0 = jnp.zeros((B, H), jnp.float32)
    c0 = jnp.zeros((B, H), jnp.float32)
    (h_last, _), _ = lax.scan(step, (h0, c0), jnp.transpose(x, (1, 0, 2)))
    return h_last @ w_fc.T + b_fc


def init_params(key, vocab_size, embed_dim, hidden_dim, output_dim):
    ks = jax.random.split(key, 7)
    bound = 1.0 / jnp.sqrt(hidden_dim)
    params = {
        # nn.Embedding default init ~ N(0, 1)
        "embedding": jax.random.normal(ks[0], (vocab_size, embed_dim), jnp.float32),
        # nn.LSTM params ~ U(-1/sqrt(H), 1/sqrt(H)); stored per-gate [i, f, g, o]
        "w_ih": jax.random.uniform(ks[1], (4, hidden_dim, embed_dim), jnp.float32,
                                   -bound, bound),
        "w_hh": jax.random.uniform(ks[2], (4, hidden_dim, hidden_dim), jnp.float32,
                                   -bound, bound),
        "b_ih": jax.random.uniform(ks[3], (4, hidden_dim), jnp.float32, -bound, bound),
        "b_hh": jax.random.uniform(ks[4], (4, hidden_dim), jnp.float32, -bound, bound),
        # nn.Linear ~ U(-1/sqrt(H), 1/sqrt(H))
        "w_fc": jax.random.uniform(ks[5], (output_dim, hidden_dim), jnp.float32,
                                   -bound, bound),
        "b_fc": jax.random.uniform(ks[6], (output_dim,), jnp.float32, -bound, bound),
    }
    return params


if __name__ == "__main__":
    VOCAB, EMBED, HIDDEN, OUT = 50, 32, 32, 3
    B, T = 2, 8

    key = jax.random.PRNGKey(0)
    k_params, k_tok = jax.random.split(key)
    params = init_params(k_params, VOCAB, EMBED, HIDDEN, OUT)
    tokens = jax.random.randint(k_tok, (B, T), 0, VOCAB, dtype=jnp.int32)

    ref = jax.block_until_ready(reference_forward(tokens, params))

    # f32 matmul operands: tight match with the reference.
    logits_f32 = jax.block_until_ready(
        toxic_text_classifier_forward(tokens, params, matmul_dtype=jnp.float32))
    assert logits_f32.shape == (B, OUT)
    assert jnp.allclose(logits_f32, ref, atol=1e-4, rtol=1e-4), (logits_f32, ref)

    # Default path: bf16 MXU operands; gate/cell math stays f32.
    logits = jax.block_until_ready(toxic_text_classifier_forward(tokens, params))
    assert logits.shape == (B, OUT)
    assert bool(jnp.all(jnp.isfinite(logits)))
    assert jnp.allclose(logits, ref, atol=2e-1), (logits, ref)

    print("KERNEL_OK")
</pallas_src>

<mosaic_0001>
module attributes {stable_mosaic.version = 11 : i64} {
  func.func @kernel(%arg0: i32, %arg1: i32, %arg2: memref<1x64x32xf32, #tpu.memory_space<vmem>>, %arg3: memref<32x128xf32, #tpu.memory_space<vmem>>, %arg4: memref<32x128xf32, #tpu.memory_space<vmem>>, %arg5: memref<1x128xf32, #tpu.memory_space<vmem>>, %arg6: memref<32x3xf32, #tpu.memory_space<vmem>>, %arg7: memref<1x3xf32, #tpu.memory_space<vmem>>, %arg8: memref<8x3xf32, #tpu.memory_space<vmem>>, %arg9: memref<64x128xf32, #tpu.memory_space<vmem>>, %arg10: memref<8x32xf32, #tpu.memory_space<vmem>>, %arg11: memref<8x32xf32, #tpu.memory_space<vmem>>) attributes {dimension_semantics = [#tpu.dimension_semantics<parallel>, #tpu.dimension_semantics<arbitrary>], iteration_bounds = array<i64: 1, 1>, scalar_prefetch = 0 : i64, scratch_operands = 3 : i64, tpu.core_type = #tpu.core_type<tc>, window_params = [{transform_indices = @transform_0, window_bounds = array<i64: 1, 64, 32>}, {pipeline_mode = #tpu.pipeline_mode<synchronous>, transform_indices = @transform_1, window_bounds = array<i64: 32, 128>}, {pipeline_mode = #tpu.pipeline_mode<synchronous>, transform_indices = @transform_2, window_bounds = array<i64: 32, 128>}, {pipeline_mode = #tpu.pipeline_mode<synchronous>, transform_indices = @transform_3, window_bounds = array<i64: 1, 128>}, {pipeline_mode = #tpu.pipeline_mode<synchronous>, transform_indices = @transform_4, window_bounds = array<i64: 32, 3>}, {pipeline_mode = #tpu.pipeline_mode<synchronous>, transform_indices = @transform_5, window_bounds = array<i64: 1, 3>}, {transform_indices = @transform_6, window_bounds = array<i64: 8, 3>}]} {
    %c0_i32 = arith.constant 0 : i32
    %0 = arith.cmpi eq, %arg1, %c0_i32 : i32
    %1 = arith.extui %0 : i1 to i32
    %c0_i32_0 = arith.constant 0 : i32
    %2 = arith.cmpi ne, %1, %c0_i32_0 : i32
    scf.if %2 {
      %cst_68 = arith.constant 0.000000e+00 : f32
      %202 = vector.broadcast %cst_68 : f32 to vector<8x32xf32>
      %c0_69 = arith.constant 0 : index
      %c0_70 = arith.constant 0 : index
      %203 = vector.load %arg10[%c0_69, %c0_70] : memref<8x32xf32, #tpu.memory_space<vmem>>, vector<8x32xf32>
      tpu.vector_store %arg10[%c0_69, %c0_70], %202 {strides = array<i32>} : memref<8x32xf32, #tpu.memory_space<vmem>>, vector<8x32xf32>,
      %cst_71 = arith.constant 0.000000e+00 : f32
      %204 = vector.broadcast %cst_71 : f32 to vector<8x32xf32>
      %c0_72 = arith.constant 0 : index
      %c0_73 = arith.constant 0 : index
      %205 = vector.load %arg11[%c0_72, %c0_73] : memref<8x32xf32, #tpu.memory_space<vmem>>, vector<8x32xf32>
      tpu.vector_store %arg11[%c0_72, %c0_73], %204 {strides = array<i32>} : memref<8x32xf32, #tpu.memory_space<vmem>>, vector<8x32xf32>,
    } else {
    }
    %c0 = arith.constant 0 : index
    %c0_1 = arith.constant 0 : index
    %c0_2 = arith.constant 0 : index
    %3 = vector.load %arg2[%c0, %c0_1, %c0_2] : memref<1x64x32xf32, #tpu.memory_space<vmem>>, vector<1x64x32xf32>
    %4 = vector.shape_cast %3 : vector<1x64x32xf32> to vector<64x32xf32>
    %c0_3 = arith.constant 0 : index
    %c0_4 = arith.constant 0 : index
    %5 = vector.load %arg3[%c0_3, %c0_4] : memref<32x128xf32, #tpu.memory_space<vmem>>, vector<32x128xf32>
    %cst = arith.constant dense<0.000000e+00> : vector<64x128xf32>
    %6 = tpu.matmul %4, %5, %cst {dimension_numbers = #tpu.dot_dimension_numbers<[1], [0], [0], [1], [0, 0, 1, 1], [], []>} : vector<64x32xf32>, vector<32x128xf32>, vector<64x128xf32> -> vector<64x128xf32>
    %c0_5 = arith.constant 0 : index
    %c0_6 = arith.constant 0 : index
    %7 = vector.load %arg5[%c0_5, %c0_6] : memref<1x128xf32, #tpu.memory_space<vmem>>, vector<1x128xf32>
    %8 = vector.broadcast %7 : vector<1x128xf32> to vector<64x128xf32>
    %9 = arith.addf %6, %8 : vector<64x128xf32>
    %c0_7 = arith.constant 0 : index
    %c0_8 = arith.constant 0 : index
    %10 = vector.load %arg9[%c0_7, %c0_8] : memref<64x128xf32, #tpu.memory_space<vmem>>, vector<64x128xf32>
    tpu.vector_store %arg9[%c0_7, %c0_8], %9 {strides = array<i32>} : memref<64x128xf32, #tpu.memory_space<vmem>>, vector<64x128xf32>,
    %c0_9 = arith.constant 0 : index
    %c0_10 = arith.constant 0 : index
    %11 = vector.load %arg10[%c0_9, %c0_10] : memref<8x32xf32, #tpu.memory_space<vmem>>, vector<8x32xf32>
    %c0_11 = arith.constant 0 : index
    %c0_12 = arith.constant 0 : index
    %12 = vector.load %arg11[%c0_11, %c0_12] : memref<8x32xf32, #tpu.memory_space<vmem>>, vector<8x32xf32>
    %c0_i32_13 = arith.constant 0 : i32
    %c8_i32 = arith.constant 8 : i32
    %13 = arith.muli %c0_i32_13, %c8_i32 : i32
    %14 = tpu.assume_multiple %13, 8 : i32
    %15 = arith.index_cast %14 : i32 to index
    %c0_14 = arith.constant 0 : index
    %16 = vector.load %arg9[%15, %c0_14] : memref<64x128xf32, #tpu.memory_space<vmem>>, vector<8x128xf32>
    %c0_15 = arith.constant 0 : index
    %c0_16 = arith.constant 0 : index
    %17 = vector.load %arg4[%c0_15, %c0_16] : memref<32x128xf32, #tpu.memory_space<vmem>>, vector<32x128xf32>
    %cst_17 = arith.constant dense<0.000000e+00> : vector<8x128xf32>
    %18 = tpu.matmul %11, %17, %cst_17 {dimension_numbers = #tpu.dot_dimension_numbers<[1], [0], [0], [1], [0, 0, 1, 1], [], []>} : vector<8x32xf32>, vector<32x128xf32>, vector<8x128xf32> -> vector<8x128xf32>
    %19 = arith.addf %16, %18 : vector<8x128xf32>
    %20 = vector.extract_strided_slice %19 {offsets = [0, 0], sizes = [8, 96], strides = [1, 1]} : vector<8x128xf32> to vector<8x96xf32>
    %21 = arith.negf %20 : vector<8x96xf32>
    %22 = math.exp %21 : vector<8x96xf32>
    %cst_18 = arith.constant 1.000000e+00 : f32
    %23 = vector.broadcast %cst_18 : f32 to vector<8x96xf32>
    %24 = arith.addf %23, %22 : vector<8x96xf32>
    %25 = arith.divf %23, %24 : vector<8x96xf32>
    %26 = vector.extract_strided_slice %25 {offsets = [0, 0], sizes = [8, 32], strides = [1, 1]} : vector<8x96xf32> to vector<8x32xf32>
    %27 = vector.extract_strided_slice %25 {offsets = [0, 32], sizes = [8, 32], strides = [1, 1]} : vector<8x96xf32> to vector<8x32xf32>
    %28 = vector.extract_strided_slice %25 {offsets = [0, 64], sizes = [8, 32], strides = [1, 1]} : vector<8x96xf32> to vector<8x32xf32>
    %29 = vector.extract_strided_slice %19 {offsets = [0, 96], sizes = [8, 32], strides = [1, 1]} : vector<8x128xf32> to vector<8x32xf32>
    %30 = math.tanh %29 : vector<8x32xf32>
    %31 = arith.mulf %27, %12 : vector<8x32xf32>
    %32 = arith.mulf %26, %30 : vector<8x32xf32>
    %33 = arith.addf %31, %32 : vector<8x32xf32>
    %34 = math.tanh %33 : vector<8x32xf32>
    %35 = arith.mulf %28, %34 : vector<8x32xf32>
    %c1_i32 = arith.constant 1 : i32
    %c8_i32_19 = arith.constant 8 : i32
    %36 = arith.muli %c1_i32, %c8_i32_19 : i32
    %37 = tpu.assume_multiple %36, 8 : i32
    %38 = arith.index_cast %37 : i32 to index
    %c0_20 = arith.constant 0 : index
    %39 = vector.load %arg9[%38, %c0_20] : memref<64x128xf32, #tpu.memory_space<vmem>>, vector<8x128xf32>
    %c0_21 = arith.constant 0 : index
    %c0_22 = arith.constant 0 : index
    %40 = vector.load %arg4[%c0_21, %c0_22] : memref<32x128xf32, #tpu.memory_space<vmem>>, vector<32x128xf32>
    %cst_23 = arith.constant dense<0.000000e+00> : vector<8x128xf32>
    %41 = tpu.matmul %35, %40, %cst_23 {dimension_numbers = #tpu.dot_dimension_numbers<[1], [0], [0], [1], [0, 0, 1, 1], [], []>} : vector<8x32xf32>, vector<32x128xf32>, vector<8x128xf32> -> vector<8x128xf32>
    %42 = arith.addf %39, %41 : vector<8x128xf32>
    %43 = vector.extract_strided_slice %42 {offsets = [0, 0], sizes = [8, 96], strides = [1, 1]} : vector<8x128xf32> to vector<8x96xf32>
    %44 = arith.negf %43 : vector<8x96xf32>
    %45 = math.exp %44 : vector<8x96xf32>
    %cst_24 = arith.constant 1.000000e+00 : f32
    %46 = vector.broadcast %cst_24 : f32 to vector<8x96xf32>
    %47 = arith.addf %46, %45 : vector<8x96xf32>
    %48 = arith.divf %46, %47 : vector<8x96xf32>
    %49 = vector.extract_strided_slice %48 {offsets = [0, 0], sizes = [8, 32], strides = [1, 1]} : vector<8x96xf32> to vector<8x32xf32>
    %50 = vector.extract_strided_slice %48 {offsets = [0, 32], sizes = [8, 32], strides = [1, 1]} : vector<8x96xf32> to vector<8x32xf32>
    %51 = vector.extract_strided_slice %48 {offsets = [0, 64], sizes = [8, 32], strides = [1, 1]} : vector<8x96xf32> to vector<8x32xf32>
    %52 = vector.extract_strided_slice %42 {offsets = [0, 96], sizes = [8, 32], strides = [1, 1]} : vector<8x128xf32> to vector<8x32xf32>
    %53 = math.tanh %52 : vector<8x32xf32>
    %54 = arith.mulf %50, %33 : vector<8x32xf32>
    %55 = arith.mulf %49, %53 : vector<8x32xf32>
    %56 = arith.addf %54, %55 : vector<8x32xf32>
    %57 = math.tanh %56 : vector<8x32xf32>
    %58 = arith.mulf %51, %57 : vector<8x32xf32>
    %c2_i32 = arith.constant 2 : i32
    %c8_i32_25 = arith.constant 8 : i32
    %59 = arith.muli %c2_i32, %c8_i32_25 : i32
    %60 = tpu.assume_multiple %59, 8 : i32
    %61 = arith.index_cast %60 : i32 to index
    %c0_26 = arith.constant 0 : index
    %62 = vector.load %arg9[%61, %c0_26] : memref<64x128xf32, #tpu.memory_space<vmem>>, vector<8x128xf32>
    %c0_27 = arith.constant 0 : index
    %c0_28 = arith.constant 0 : index
    %63 = vector.load %arg4[%c0_27, %c0_28] : memref<32x128xf32, #tpu.memory_space<vmem>>, vector<32x128xf32>
    %cst_29 = arith.constant dense<0.000000e+00> : vector<8x128xf32>
    %64 = tpu.matmul %58, %63, %cst_29 {dimension_numbers = #tpu.dot_dimension_numbers<[1], [0], [0], [1], [0, 0, 1, 1], [], []>} : vector<8x32xf32>, vector<32x128xf32>, vector<8x128xf32> -> vector<8x128xf32>
    %65 = arith.addf %62, %64 : vector<8x128xf32>
    %66 = vector.extract_strided_slice %65 {offsets = [0, 0], sizes = [8, 96], strides = [1, 1]} : vector<8x128xf32> to vector<8x96xf32>
    %67 = arith.negf %66 : vector<8x96xf32>
    %68 = math.exp %67 : vector<8x96xf32>
    %cst_30 = arith.constant 1.000000e+00 : f32
    %69 = vector.broadcast %cst_30 : f32 to vector<8x96xf32>
    %70 = arith.addf %69, %68 : vector<8x96xf32>
    %71 = arith.divf %69, %70 : vector<8x96xf32>
    %72 = vector.extract_strided_slice %71 {offsets = [0, 0], sizes = [8, 32], strides = [1, 1]} : vector<8x96xf32> to vector<8x32xf32>
    %73 = vector.extract_strided_slice %71 {offsets = [0, 32], sizes = [8, 32], strides = [1, 1]} : vector<8x96xf32> to vector<8x32xf32>
    %74 = vector.extract_strided_slice %71 {offsets = [0, 64], sizes = [8, 32], strides = [1, 1]} : vector<8x96xf32> to vector<8x32xf32>
    %75 = vector.extract_strided_slice %65 {offsets = [0, 96], sizes = [8, 32], strides = [1, 1]} : vector<8x128xf32> to vector<8x32xf32>
    %76 = math.tanh %75 : vector<8x32xf32>
    %77 = arith.mulf %73, %56 : vector<8x32xf32>
    %78 = arith.mulf %72, %76 : vector<8x32xf32>
    %79 = arith.addf %77, %78 : vector<8x32xf32>
    %80 = math.tanh %79 : vector<8x32xf32>
    %81 = arith.mulf %74, %80 : vector<8x32xf32>
    %c3_i32 = arith.constant 3 : i32
    %c8_i32_31 = arith.constant 8 : i32
    %82 = arith.muli %c3_i32, %c8_i32_31 : i32
    %83 = tpu.assume_multiple %82, 8 : i32
    %84 = arith.index_cast %83 : i32 to index
    %c0_32 = arith.constant 0 : index
    %85 = vector.load %arg9[%84, %c0_32] : memref<64x128xf32, #tpu.memory_space<vmem>>, vector<8x128xf32>
    %c0_33 = arith.constant 0 : index
    %c0_34 = arith.constant 0 : index
    %86 = vector.load %arg4[%c0_33, %c0_34] : memref<32x128xf32, #tpu.memory_space<vmem>>, vector<32x128xf32>
    %cst_35 = arith.constant dense<0.000000e+00> : vector<8x128xf32>
    %87 = tpu.matmul %81, %86, %cst_35 {dimension_numbers = #tpu.dot_dimension_numbers<[1], [0], [0], [1], [0, 0, 1, 1], [], []>} : vector<8x32xf32>, vector<32x128xf32>, vector<8x128xf32> -> vector<8x128xf32>
    %88 = arith.addf %85, %87 : vector<8x128xf32>
    %89 = vector.extract_strided_slice %88 {offsets = [0, 0], sizes = [8, 96], strides = [1, 1]} : vector<8x128xf32> to vector<8x96xf32>
    %90 = arith.negf %89 : vector<8x96xf32>
    %91 = math.exp %90 : vector<8x96xf32>
    %cst_36 = arith.constant 1.000000e+00 : f32
    %92 = vector.broadcast %cst_36 : f32 to vector<8x96xf32>
    %93 = arith.addf %92, %91 : vector<8x96xf32>
    %94 = arith.divf %92, %93 : vector<8x96xf32>
    %95 = vector.extract_strided_slice %94 {offsets = [0, 0], sizes = [8, 32], strides = [1, 1]} : vector<8x96xf32> to vector<8x32xf32>
    %96 = vector.extract_strided_slice %94 {offsets = [0, 32], sizes = [8, 32], strides = [1, 1]} : vector<8x96xf32> to vector<8x32xf32>
    %97 = vector.extract_strided_slice %94 {offsets = [0, 64], sizes = [8, 32], strides = [1, 1]} : vector<8x96xf32> to vector<8x32xf32>
    %98 = vector.extract_strided_slice %88 {offsets = [0, 96], sizes = [8, 32], strides = [1, 1]} : vector<8x128xf32> to vector<8x32xf32>
    %99 = math.tanh %98 : vector<8x32xf32>
    %100 = arith.mulf %96, %79 : vector<8x32xf32>
    %101 = arith.mulf %95, %99 : vector<8x32xf32>
    %102 = arith.addf %100, %101 : vector<8x32xf32>
    %103 = math.tanh %102 : vector<8x32xf32>
    %104 = arith.mulf %97, %103 : vector<8x32xf32>
    %c4_i32 = arith.constant 4 : i32
    %c8_i32_37 = arith.constant 8 : i32
    %105 = arith.muli %c4_i32, %c8_i32_37 : i32
    %106 = tpu.assume_multiple %105, 8 : i32
    %107 = arith.index_cast %106 : i32 to index
    %c0_38 = arith.constant 0 : index
    %108 = vector.load %arg9[%107, %c0_38] : memref<64x128xf32, #tpu.memory_space<vmem>>, vector<8x128xf32>
    %c0_39 = arith.constant 0 : index
    %c0_40 = arith.constant 0 : index
    %109 = vector.load %arg4[%c0_39, %c0_40] : memref<32x128xf32, #tpu.memory_space<vmem>>, vector<32x128xf32>
    %cst_41 = arith.constant dense<0.000000e+00> : vector<8x128xf32>
    %110 = tpu.matmul %104, %109, %cst_41 {dimension_numbers = #tpu.dot_dimension_numbers<[1], [0], [0], [1], [0, 0, 1, 1], [], []>} : vector<8x32xf32>, vector<32x128xf32>, vector<8x128xf32> -> vector<8x128xf32>
    %111 = arith.addf %108, %110 : vector<8x128xf32>
    %112 = vector.extract_strided_slice %111 {offsets = [0, 0], sizes = [8, 96], strides = [1, 1]} : vector<8x128xf32> to vector<8x96xf32>
    %113 = arith.negf %112 : vector<8x96xf32>
    %114 = math.exp %113 : vector<8x96xf32>
    %cst_42 = arith.constant 1.000000e+00 : f32
    %115 = vector.broadcast %cst_42 : f32 to vector<8x96xf32>
    %116 = arith.addf %115, %114 : vector<8x96xf32>
    %117 = arith.divf %115, %116 : vector<8x96xf32>
    %118 = vector.extract_strided_slice %117 {offsets = [0, 0], sizes = [8, 32], strides = [1, 1]} : vector<8x96xf32> to vector<8x32xf32>
    %119 = vector.extract_strided_slice %117 {offsets = [0, 32], sizes = [8, 32], strides = [1, 1]} : vector<8x96xf32> to vector<8x32xf32>
    %120 = vector.extract_strided_slice %117 {offsets = [0, 64], sizes = [8, 32], strides = [1, 1]} : vector<8x96xf32> to vector<8x32xf32>
    %121 = vector.extract_strided_slice %111 {offsets = [0, 96], sizes = [8, 32], strides = [1, 1]} : vector<8x128xf32> to vector<8x32xf32>
    %122 = math.tanh %121 : vector<8x32xf32>
    %123 = arith.mulf %119, %102 : vector<8x32xf32>
    %124 = arith.mulf %118, %122 : vector<8x32xf32>
    %125 = arith.addf %123, %124 : vector<8x32xf32>
    %126 = math.tanh %125 : vector<8x32xf32>
    %127 = arith.mulf %120, %126 : vector<8x32xf32>
    %c5_i32 = arith.constant 5 : i32
    %c8_i32_43 = arith.constant 8 : i32
    %128 = arith.muli %c5_i32, %c8_i32_43 : i32
    %129 = tpu.assume_multiple %128, 8 : i32
    %130 = arith.index_cast %129 : i32 to index
    %c0_44 = arith.constant 0 : index
    %131 = vector.load %arg9[%130, %c0_44] : memref<64x128xf32, #tpu.memory_space<vmem>>, vector<8x128xf32>
    %c0_45 = arith.constant 0 : index
    %c0_46 = arith.constant 0 : index
    %132 = vector.load %arg4[%c0_45, %c0_46] : memref<32x128xf32, #tpu.memory_space<vmem>>, vector<32x128xf32>
    %cst_47 = arith.constant dense<0.000000e+00> : vector<8x128xf32>
    %133 = tpu.matmul %127, %132, %cst_47 {dimension_numbers = #tpu.dot_dimension_numbers<[1], [0], [0], [1], [0, 0, 1, 1], [], []>} : vector<8x32xf32>, vector<32x128xf32>, vector<8x128xf32> -> vector<8x128xf32>
    %134 = arith.addf %131, %133 : vector<8x128xf32>
    %135 = vector.extract_strided_slice %134 {offsets = [0, 0], sizes = [8, 96], strides = [1, 1]} : vector<8x128xf32> to vector<8x96xf32>
    %136 = arith.negf %135 : vector<8x96xf32>
    %137 = math.exp %136 : vector<8x96xf32>
    %cst_48 = arith.constant 1.000000e+00 : f32
    %138 = vector.broadcast %cst_48 : f32 to vector<8x96xf32>
    %139 = arith.addf %138, %137 : vector<8x96xf32>
    %140 = arith.divf %138, %139 : vector<8x96xf32>
    %141 = vector.extract_strided_slice %140 {offsets = [0, 0], sizes = [8, 32], strides = [1, 1]} : vector<8x96xf32> to vector<8x32xf32>
    %142 = vector.extract_strided_slice %140 {offsets = [0, 32], sizes = [8, 32], strides = [1, 1]} : vector<8x96xf32> to vector<8x32xf32>
    %143 = vector.extract_strided_slice %140 {offsets = [0, 64], sizes = [8, 32], strides = [1, 1]} : vector<8x96xf32> to vector<8x32xf32>
    %144 = vector.extract_strided_slice %134 {offsets = [0, 96], sizes = [8, 32], strides = [1, 1]} : vector<8x128xf32> to vector<8x32xf32>
    %145 = math.tanh %144 : vector<8x32xf32>
    %146 = arith.mulf %142, %125 : vector<8x32xf32>
    %147 = arith.mulf %141, %145 : vector<8x32xf32>
    %148 = arith.addf %146, %147 : vector<8x32xf32>
    %149 = math.tanh %148 : vector<8x32xf32>
    %150 = arith.mulf %143, %149 : vector<8x32xf32>
    %c6_i32 = arith.constant 6 : i32
    %c8_i32_49 = arith.constant 8 : i32
    %151 = arith.muli %c6_i32, %c8_i32_49 : i32
    %152 = tpu.assume_multiple %151, 8 : i32
    %153 = arith.index_cast %152 : i32 to index
    %c0_50 = arith.constant 0 : index
    %154 = vector.load %arg9[%153, %c0_50] : memref<64x128xf32, #tpu.memory_space<vmem>>, vector<8x128xf32>
    %c0_51 = arith.constant 0 : index
    %c0_52 = arith.constant 0 : index
    %155 = vector.load %arg4[%c0_51, %c0_52] : memref<32x128xf32, #tpu.memory_space<vmem>>, vector<32x128xf32>
    %cst_53 = arith.constant dense<0.000000e+00> : vector<8x128xf32>
    %156 = tpu.matmul %150, %155, %cst_53 {dimension_numbers = #tpu.dot_dimension_numbers<[1], [0], [0], [1], [0, 0, 1, 1], [], []>} : vector<8x32xf32>, vector<32x128xf32>, vector<8x128xf32> -> vector<8x128xf32>
    %157 = arith.addf %154, %156 : vector<8x128xf32>
    %158 = vector.extract_strided_slice %157 {offsets = [0, 0], sizes = [8, 96], strides = [1, 1]} : vector<8x128xf32> to vector<8x96xf32>
    %159 = arith.negf %158 : vector<8x96xf32>
    %160 = math.exp %159 : vector<8x96xf32>
    %cst_54 = arith.constant 1.000000e+00 : f32
    %161 = vector.broadcast %cst_54 : f32 to vector<8x96xf32>
    %162 = arith.addf %161, %160 : vector<8x96xf32>
    %163 = arith.divf %161, %162 : vector<8x96xf32>
    %164 = vector.extract_strided_slice %163 {offsets = [0, 0], sizes = [8, 32], strides = [1, 1]} : vector<8x96xf32> to vector<8x32xf32>
    %165 = vector.extract_strided_slice %163 {offsets = [0, 32], sizes = [8, 32], strides = [1, 1]} : vector<8x96xf32> to vector<8x32xf32>
    %166 = vector.extract_strided_slice %163 {offsets = [0, 64], sizes = [8, 32], strides = [1, 1]} : vector<8x96xf32> to vector<8x32xf32>
    %167 = vector.extract_strided_slice %157 {offsets = [0, 96], sizes = [8, 32], strides = [1, 1]} : vector<8x128xf32> to vector<8x32xf32>
    %168 = math.tanh %167 : vector<8x32xf32>
    %169 = arith.mulf %165, %148 : vector<8x32xf32>
    %170 = arith.mulf %164, %168 : vector<8x32xf32>
    %171 = arith.addf %169, %170 : vector<8x32xf32>
    %172 = math.tanh %171 : vector<8x32xf32>
    %173 = arith.mulf %166, %172 : vector<8x32xf32>
    %c7_i32 = arith.constant 7 : i32
    %c8_i32_55 = arith.constant 8 : i32
    %174 = arith.muli %c7_i32, %c8_i32_55 : i32
    %175 = tpu.assume_multiple %174, 8 : i32
    %176 = arith.index_cast %175 : i32 to index
    %c0_56 = arith.constant 0 : index
    %177 = vector.load %arg9[%176, %c0_56] : memref<64x128xf32, #tpu.memory_space<vmem>>, vector<8x128xf32>
    %c0_57 = arith.constant 0 : index
    %c0_58 = arith.constant 0 : index
    %178 = vector.load %arg4[%c0_57, %c0_58] : memref<32x128xf32, #tpu.memory_space<vmem>>, vector<32x128xf32>
    %cst_59 = arith.constant dense<0.000000e+00> : vector<8x128xf32>
    %179 = tpu.matmul %173, %178, %cst_59 {dimension_numbers = #tpu.dot_dimension_numbers<[1], [0], [0], [1], [0, 0, 1, 1], [], []>} : vector<8x32xf32>, vector<32x128xf32>, vector<8x128xf32> -> vector<8x128xf32>
    %180 = arith.addf %177, %179 : vector<8x128xf32>
    %181 = vector.extract_strided_slice %180 {offsets = [0, 0], sizes = [8, 96], strides = [1, 1]} : vector<8x128xf32> to vector<8x96xf32>
    %182 = arith.negf %181 : vector<8x96xf32>
    %183 = math.exp %182 : vector<8x96xf32>
    %cst_60 = arith.constant 1.000000e+00 : f32
    %184 = vector.broadcast %cst_60 : f32 to vector<8x96xf32>
    %185 = arith.addf %184, %183 : vector<8x96xf32>
    %186 = arith.divf %184, %185 : vector<8x96xf32>
    %187 = vector.extract_strided_slice %186 {offsets = [0, 0], sizes = [8, 32], strides = [1, 1]} : vector<8x96xf32> to vector<8x32xf32>
    %188 = vector.extract_strided_slice %186 {offsets = [0, 32], sizes = [8, 32], strides = [1, 1]} : vector<8x96xf32> to vector<8x32xf32>
    %189 = vector.extract_strided_slice %186 {offsets = [0, 64], sizes = [8, 32], strides = [1, 1]} : vector<8x96xf32> to vector<8x32xf32>
    %190 = vector.extract_strided_slice %180 {offsets = [0, 96], sizes = [8, 32], strides = [1, 1]} : vector<8x128xf32> to vector<8x32xf32>
    %191 = math.tanh %190 : vector<8x32xf32>
    %192 = arith.mulf %188, %171 : vector<8x32xf32>
    %193 = arith.mulf %187, %191 : vector<8x32xf32>
    %194 = arith.addf %192, %193 : vector<8x32xf32>
    %195 = math.tanh %194 : vector<8x32xf32>
    %196 = arith.mulf %189, %195 : vector<8x32xf32>
    %c8_i32_61 = arith.constant 8 : i32
    %c0_62 = arith.constant 0 : index
    %c0_63 = arith.constant 0 : index
    %197 = vector.load %arg10[%c0_62, %c0_63] : memref<8x32xf32, #tpu.memory_space<vmem>>, vector<8x32xf32>
    tpu.vector_store %arg10[%c0_62, %c0_63], %196 {strides = array<i32>} : memref<8x32xf32, #tpu.memory_space<vmem>>, vector<8x32xf32>,
    %c0_64 = arith.constant 0 : index
    %c0_65 = arith.constant 0 : index
    %198 = vector.load %arg11[%c0_64, %c0_65] : memref<8x32xf32, #tpu.memory_space<vmem>>, vector<8x32xf32>
    tpu.vector_store %arg11[%c0_64, %c0_65], %194 {strides = array<i32>} : memref<8x32xf32, #tpu.memory_space<vmem>>, vector<8x32xf32>,
    %c0_i32_66 = arith.constant 0 : i32
    %199 = arith.cmpi eq, %arg1, %c0_i32_66 : i32
    %200 = arith.extui %199 : i1 to i32
    %c0_i32_67 = arith.constant 0 : i32
    %201 = arith.cmpi ne, %200, %c0_i32_67 : i32
    scf.if %201 {
      %c0_68 = arith.constant 0 : index
      %c0_69 = arith.constant 0 : index
      %202 = vector.load %arg6[%c0_68, %c0_69] : memref<32x3xf32, #tpu.memory_space<vmem>>, vector<32x3xf32>
      %cst_70 = arith.constant dense<0.000000e+00> : vector<8x3xf32>
      %203 = tpu.matmul %196, %202, %cst_70 {dimension_numbers = #tpu.dot_dimension_numbers<[1], [0], [0], [1], [0, 0, 1, 1], [], []>} : vector<8x32xf32>, vector<32x3xf32>, vector<8x3xf32> -> vector<8x3xf32>
      %c0_71 = arith.constant 0 : index
      %c0_72 = arith.constant 0 : index
      %204 = vector.load %arg7[%c0_71, %c0_72] : memref<1x3xf32, #tpu.memory_space<vmem>>, vector<1x3xf32>
      %205 = vector.broadcast %204 : vector<1x3xf32> to vector<8x3xf32>
      %206 = arith.addf %203, %205 : vector<8x3xf32>
      %c0_73 = arith.constant 0 : index
      %c0_74 = arith.constant 0 : index
      %207 = vector.load %arg8[%c0_73, %c0_74] : memref<8x3xf32, #tpu.memory_space<vmem>>, vector<8x3xf32>
      tpu.vector_store %arg8[%c0_73, %c0_74], %206 {strides = array<i32>} : memref<8x3xf32, #tpu.memory_space<vmem>>, vector<8x3xf32>,
    } else {
    }
    return
  }
  func.func @transform_0(%arg0: i32, %arg1: i32) -> (i32, i32, i32) {
    %c0_i32 = arith.constant 0 : i32
    %c0_i32_0 = arith.constant 0 : i32
    return %arg0, %arg1, %c0_i32 : i32, i32, i32
  }
  func.func @transform_1(%arg0: i32, %arg1: i32) -> (i32, i32) {
    %c0_i32 = arith.constant 0 : i32
    %c0_i32_0 = arith.constant 0 : i32
    %c0_i32_1 = arith.constant 0 : i32
    return %c0_i32, %c0_i32_0 : i32, i32
  }
  func.func @transform_2(%arg0: i32, %arg1: i32) -> (i32, i32) {
    %c0_i32 = arith.constant 0 : i32
    %c0_i32_0 = arith.constant 0 : i32
    %c0_i32_1 = arith.constant 0 : i32
    return %c0_i32, %c0_i32_0 : i32, i32
  }
  func.func @transform_3(%arg0: i32, %arg1: i32) -> (i32, i32) {
    %c0_i32 = arith.constant 0 : i32
    %c0_i32_0 = arith.constant 0 : i32
    %c0_i32_1 = arith.constant 0 : i32
    return %c0_i32, %c0_i32_0 : i32, i32
  }
  func.func @transform_4(%arg0: i32, %arg1: i32) -> (i32, i32) {
    %c0_i32 = arith.constant 0 : i32
    %c0_i32_0 = arith.constant 0 : i32
    %c0_i32_1 = arith.constant 0 : i32
    return %c0_i32, %c0_i32_0 : i32, i32
  }
  func.func @transform_5(%arg0: i32, %arg1: i32) -> (i32, i32) {
    %c0_i32 = arith.constant 0 : i32
    %c0_i32_0 = arith.constant 0 : i32
    %c0_i32_1 = arith.constant 0 : i32
    return %c0_i32, %c0_i32_0 : i32, i32
  }
  func.func @transform_6(%arg0: i32, %arg1: i32) -> (i32, i32) {
    %c0_i32 = arith.constant 0 : i32
    %c0_i32_0 = arith.constant 0 : i32
    return %arg0, %c0_i32 : i32, i32
  }
}

</mosaic_0001>

<llo_original>
// kernel: toxic_text_classifier_forward.1
$region0: #{toxic_text_classifier_forward.1}
  #allocation0 [shape = 'u32[]', space=smem, size = 0x4, offset = 0x4, fixed_abs, tag = 'smem constant byte address 0x4 - core index']
  #allocation1 [shape = 'u32[144,128]{1,0:T(1,128)}', space=vmem, size = 0x12000, scoped, tag = 'internal scratch']
  #allocation2 [shape = 'f32[64,128]{1,0:T(8,128)}', space=vmem, size = 0x8000, scoped, tag = 'scratch operand']
  #allocation3 [shape = 'f32[8,32]{1,0:T(8,128)}', space=vmem, size = 0x1000, scoped, tag = 'scratch operand']
  #allocation4 [shape = 'f32[8,32]{1,0:T(8,128)}', space=vmem, size = 0x1000, scoped, tag = 'scratch operand']
  %s0 = inlined_call_operand.vmem [shape: f32[1,64,32], index: 0, kind: input, shape index: {}]
  %s1 = inlined_call_operand.vmem [shape: f32[32,128], index: 1, kind: input, shape index: {}]
  %s2 = inlined_call_operand.vmem [shape: f32[32,128], index: 2, kind: input, shape index: {}]
  %s3 = inlined_call_operand.vmem [shape: f32[1,128], index: 3, kind: input, shape index: {}]
  %s4 = inlined_call_operand.vmem [shape: f32[32,3], index: 4, kind: input, shape index: {}]
  %s5 = inlined_call_operand.vmem [shape: f32[1,3], index: 5, kind: input, shape index: {}]
  %s6 = inlined_call_operand.vmem [shape: f32[8,3], index: 6, kind: output, shape index: {}]
  %s7 = sld [smem:[#allocation0]]
  $region42: #{toxic_text_classifier_forward.1} parent=0
    _
  %s9 = ssub.s32 1, %s7
  %s10 = scalar_select 0, %s9, %s7
  // Predicated region
  $region2: #{toxic_text_classifier_forward.1} parent=0 // pred_check
    _
  $region3: #{toxic_text_classifier_forward.1} parent=0 // pred_check_branch
    %12 = sbr.rel (0) target = $region5
  $region4: #{toxic_text_classifier_forward.1} parent=0 // pred_region
    _
  $region5: #{toxic_text_classifier_forward.1} parent=0 // pred_fallthru
    _
  // Predicated region
  $region6: #{toxic_text_classifier_forward.1} parent=0 // pred_check
    _
  $region7: #{toxic_text_classifier_forward.1} parent=0 // pred_check_branch
    %14 = sbr.rel (0) target = $region9
  $region8: #{toxic_text_classifier_forward.1} parent=0 // pred_region
    _
  $region9: #{toxic_text_classifier_forward.1} parent=0 // pred_fallthru
    _
  // Predicated region
  $region10: #{toxic_text_classifier_forward.1} parent=0 // pred_check
    _
  $region11: #{toxic_text_classifier_forward.1} parent=0 // pred_check_branch
    %16 = sbr.rel (0) target = $region13
  $region12: #{toxic_text_classifier_forward.1} parent=0 // pred_region
    _
  $region13: #{toxic_text_classifier_forward.1} parent=0 // pred_fallthru
    _
  // Predicated region
  $region14: #{toxic_text_classifier_forward.1} parent=0 // pred_check
    _
  $region15: #{toxic_text_classifier_forward.1} parent=0 // pred_check_branch
    %18 = sbr.rel (0) target = $region17
  $region16: #{toxic_text_classifier_forward.1} parent=0 // pred_region
    _
  $region17: #{toxic_text_classifier_forward.1} parent=0 // pred_fallthru
    _
  // Predicated region
  $region18: #{toxic_text_classifier_forward.1} parent=0 // pred_check
    _
  $region19: #{toxic_text_classifier_forward.1} parent=0 // pred_check_branch
    %20 = sbr.rel (0) target = $region21
  $region20: #{toxic_text_classifier_forward.1} parent=0 // pred_region
    _
  $region21: #{toxic_text_classifier_forward.1} parent=0 // pred_fallthru
    _
  // Predicated region
  $region22: #{toxic_text_classifier_forward.1} parent=0 // pred_check
    _
  $region23: #{toxic_text_classifier_forward.1} parent=0 // pred_check_branch
    %22 = sbr.rel (0) target = $region25
  $region24: #{toxic_text_classifier_forward.1} parent=0 // pred_region
    _
  $region25: #{toxic_text_classifier_forward.1} parent=0 // pred_fallthru
    _
  %p23 = scmp.eq.s32.totalorder 0, 0
  // Predicated region
  $region26: #{toxic_text_classifier_forward.1} parent=0 // pred_check
    %p24 = pneg %p23
  $region27: #{toxic_text_classifier_forward.1} parent=0 // pred_check_branch
    %26 = sbr.rel (%p24) target = $region29
  $region28: #{toxic_text_classifier_forward.1} parent=0 // pred_region
    %vm27 = vcmask 261120
    %28 = vst.msk [vmem:[#allocation3] sm:$0xff] %vm27, 0.0
    %29 = vst.msk [vmem:[#allocation4] sm:$0xff] %vm27, 0.0
  $region29: #{toxic_text_classifier_forward.1} parent=0 // pred_fallthru
    _
  %v30 = vld [vmem:[%s0] sm:$0xff]
  %v31 = vld [vmem:[%s0 + $0x8] sm:$0xff]
  %v32 = vld [vmem:[%s0 + $0x10] sm:$0xff]
  %v33 = vld [vmem:[%s0 + $0x18] sm:$0xff]
  %v34 = vld [vmem:[%s0 + $0x20] sm:$0xff]
  %v35 = vld [vmem:[%s0 + $0x28] sm:$0xff]
  %v36 = vld [vmem:[%s0 + $0x30] sm:$0xff]
  %v37 = vld [vmem:[%s0 + $0x38] sm:$0xff]
  %v38 = vld [vmem:[%s1] sm:$0xff]
  %v39 = vld [vmem:[%s1 + $0x8] sm:$0xff]
  %v40 = vld [vmem:[%s1 + $0x10] sm:$0xff]
  %v41 = vld [vmem:[%s1 + $0x18] sm:$0xff]
  %v42 = vld [vmem:[%s3] sm:$0x1]
  %v44 = vlaneseq
  %v45 = vshrl.u32 %v44, 7
  %v46 = vsub.s32 0, %v45
  %v47 = vrot.slane %v42, %v46
  %vm49 = vcmask 261120
  %v51 = vsel %vm49, %v30, 0
  %v54 = vsel %vm49, %v31, 0
  %v57 = vsel %vm49, %v32, 0
  %v60 = vsel %vm49, %v33, 0
  %v63 = vsel %vm49, %v34, 0
  %v66 = vsel %vm49, %v35, 0
  %v69 = vsel %vm49, %v36, 0
  %v72 = vsel %vm49, %v37, 0
  %74 = vmatprep.subr.mxu0 0.0
  %75 = vmatpush1.msra.mxu0 %v38
  %76 = vmatprep.subr.mxu0 0.0
  %77 = vmatpush1.msra.mxu0 %v39
  %78 = vmatprep.subr.mxu0 0.0
  %79 = vmatpush1.msra.mxu0 %v40
  %80 = vmatprep.subr.mxu0 0.0
  %81 = vmatpush1.msra.mxu0 %v41
  %82 = vmatprep.subr.mxu0 0.0
  %83 = vmatpush1.msra.mxu0 0.0
  %84 = vmatprep.subr.mxu0 0.0
  %85 = vmatpush1.msra.mxu0 0.0
  %86 = vmatprep.subr.mxu0 0.0
  %87 = vmatpush1.msra.mxu0 0.0
  %88 = vmatprep.subr.mxu0 0.0
  %89 = vmatpush1.msra.mxu0 0.0
  %90 = vmatprep.subr.mxu0 0.0
  %91 = vmatpush1.msra.mxu0 0.0
  %92 = vmatprep.subr.mxu0 0.0
  %93 = vmatpush1.msra.mxu0 0.0
  %94 = vmatprep.subr.mxu0 0.0
  %95 = vmatpush1.msra.mxu0 0.0
  %96 = vmatprep.subr.mxu0 0.0
  %97 = vmatpush1.msra.mxu0 0.0
  %98 = vmatprep.subr.mxu0 0.0
  %99 = vmatpush1.msra.mxu0 0.0
  %100 = vmatprep.subr.mxu0 0.0
  %101 = vmatpush1.msra.mxu0 0.0
  %102 = vmatprep.subr.mxu0 0.0
  %103 = vmatpush1.msra.mxu0 0.0
  %104 = vmatprep.subr.mxu0 0.0
  %105 = vmatpush1.msra.mxu0 0.0
  %106 = vmatprep.subr.mxu0 0.0
  %107 = vmatpush1.msra.mxu0 0.0
  %108 = vmatprep.subr.mxu0 0.0
  %109 = vmatpush1.msra.mxu0 0.0
  %110 = vmatprep.subr.mxu0 0.0
  %111 = vmatpush1.msra.mxu0 0.0
  %112 = vmatprep.subr.mxu0 0.0
  %113 = vmatpush1.msra.mxu0 0.0
  %114 = vmatprep.subr.mxu0 0.0
  %115 = vmatpush1.msra.mxu0 0.0
  %116 = vmatprep.subr.mxu0 0.0
  %117 = vmatpush1.msra.mxu0 0.0
  %118 = vmatprep.subr.mxu0 0.0
  %119 = vmatpush1.msra.mxu0 0.0
  %120 = vmatprep.subr.mxu0 0.0
  %121 = vmatpush1.msra.mxu0 0.0
  %122 = vmatprep.subr.mxu0 0.0
  %123 = vmatpush1.msra.mxu0 0.0
  %124 = vmatprep.subr.mxu0 0.0
  %125 = vmatpush1.msra.mxu0 0.0
  %126 = vmatprep.subr.mxu0 0.0
  %127 = vmatpush1.msra.mxu0 0.0
  %128 = vmatprep.subr.mxu0 0.0
  %129 = vmatpush1.msra.mxu0 0.0
  %130 = vmatprep.subr.mxu0 0.0
  %131 = vmatpush1.msra.mxu0 0.0
  %132 = vmatprep.subr.mxu0 0.0
  %133 = vmatpush1.msra.mxu0 0.0
  %134 = vmatprep.subr.mxu0 0.0
  %135 = vmatpush1.msra.mxu0 0.0
  %136 = vmatprep.subr.mxu0 0.0
  %137 = vmatpush1.msra.mxu0 0.0
  %138 = vmatprep.mubr.f32.mxu0 0.0
  %139 = vmatmul.mubr.f32.gmra.mrb[0].mxu0 %v51
  %v140 = vpop.f32.mrb[0].mxu0
  %v141 = vadd.f32 %v47, %v140
  %v142 = vpop.f32.mrb[0].mxu0
  %143 = vmatprep.mubr.f32.mxu0 0.0
  %144 = vmatmul.mubr.f32.gmra.mrb[0].mxu0 %v54
  %v145 = vpop.f32.mrb[0].mxu0
  %v146 = vadd.f32 %v47, %v145
  %v147 = vpop.f32.mrb[0].mxu0
  %148 = vmatprep.mubr.f32.mxu0 0.0
  %149 = vmatmul.mubr.f32.gmra.mrb[0].mxu0 %v57
  %v150 = vpop.f32.mrb[0].mxu0
  %v151 = vadd.f32 %v47, %v150
  %v152 = vpop.f32.mrb[0].mxu0
  %153 = vmatprep.mubr.f32.mxu0 0.0
  %154 = vmatmul.mubr.f32.gmra.mrb[0].mxu0 %v60
  %v155 = vpop.f32.mrb[0].mxu0
  %v156 = vadd.f32 %v47, %v155
  %v157 = vpop.f32.mrb[0].mxu0
  %158 = vmatprep.mubr.f32.mxu0 0.0
  %159 = vmatmul.mubr.f32.gmra.mrb[0].mxu0 %v63
  %v160 = vpop.f32.mrb[0].mxu0
  %v161 = vadd.f32 %v47, %v160
  %v162 = vpop.f32.mrb[0].mxu0
  %163 = vmatprep.mubr.f32.mxu0 0.0
  %164 = vmatmul.mubr.f32.gmra.mrb[0].mxu0 %v66
  %v165 = vpop.f32.mrb[0].mxu0
  %v166 = vadd.f32 %v47, %v165
  %v167 = vpop.f32.mrb[0].mxu0
  %168 = vmatprep.mubr.f32.mxu0 0.0
  %169 = vmatmul.mubr.f32.gmra.mrb[0].mxu0 %v69
  %v170 = vpop.f32.mrb[0].mxu0
  %v171 = vadd.f32 %v47, %v170
  %v172 = vpop.f32.mrb[0].mxu0
  %173 = vmatprep.mubr.f32.mxu0 0.0
  %174 = vmatmul.mubr.f32.gmra.mrb[0].mxu0 %v72
  %v175 = vpop.f32.mrb[0].mxu0
  %v176 = vadd.f32 %v47, %v175
  %v177 = vpop.f32.mrb[0].mxu0
  %178 = vdwg.mxu0
  %179 = vst [vmem:[#allocation2] sm:$0xff] %v141
  %180 = vst [vmem:[#allocation2 + $0x8] sm:$0xff] %v146
  %181 = vst [vmem:[#allocation2 + $0x10] sm:$0xff] %v151
  %182 = vst [vmem:[#allocation2 + $0x18] sm:$0xff] %v156
  %183 = vst [vmem:[#allocation2 + $0x20] sm:$0xff] %v161
  %184 = vst [vmem:[#allocation2 + $0x28] sm:$0xff] %v166
  %185 = vst [vmem:[#allocation2 + $0x30] sm:$0xff] %v171
  %186 = vst [vmem:[#allocation2 + $0x38] sm:$0xff] %v176
  %v187 = vld [vmem:[#allocation3] sm:$0xff]
  %v188 = vld [vmem:[#allocation4] sm:$0xff]
  %v189 = vld [vmem:[#allocation2] sm:$0xff]
  %v190 = vld [vmem:[%s2] sm:$0xff]
  %v191 = vld [vmem:[%s2 + $0x8] sm:$0xff]
  %v192 = vld [vmem:[%s2 + $0x10] sm:$0xff]
  %v193 = vld [vmem:[%s2 + $0x18] sm:$0xff]
  %v195 = vsel %vm49, %v187, 0
  %197 = vmatprep.subr.mxu0 0.0
  %198 = vmatpush1.msra.mxu0 %v190
  %199 = vmatprep.subr.mxu0 0.0
  %200 = vmatpush1.msra.mxu0 %v191
  %201 = vmatprep.subr.mxu0 0.0
  %202 = vmatpush1.msra.mxu0 %v192
  %203 = vmatprep.subr.mxu0 0.0
  %204 = vmatpush1.msra.mxu0 %v193
  %205 = vmatprep.subr.mxu0 0.0
  %206 = vmatpush1.msra.mxu0 0.0
  %207 = vmatprep.subr.mxu0 0.0
  %208 = vmatpush1.msra.mxu0 0.0
  %209 = vmatprep.subr.mxu0 0.0
  %210 = vmatpush1.msra.mxu0 0.0
  %211 = vmatprep.subr.mxu0 0.0
  %212 = vmatpush1.msra.mxu0 0.0
  %213 = vmatprep.subr.mxu0 0.0
  %214 = vmatpush1.msra.mxu0 0.0
  %215 = vmatprep.subr.mxu0 0.0
  %216 = vmatpush1.msra.mxu0 0.0
  %217 = vmatprep.subr.mxu0 0.0
  %218 = vmatpush1.msra.mxu0 0.0
  %219 = vmatprep.subr.mxu0 0.0
  %220 = vmatpush1.msra.mxu0 0.0
  %221 = vmatprep.subr.mxu0 0.0
  %222 = vmatpush1.msra.mxu0 0.0
  %223 = vmatprep.subr.mxu0 0.0
  %224 = vmatpush1.msra.mxu0 0.0
  %225 = vmatprep.subr.mxu0 0.0
  %226 = vmatpush1.msra.mxu0 0.0
  %227 = vmatprep.subr.mxu0 0.0
  %228 = vmatpush1.msra.mxu0 0.0
  %229 = vmatprep.subr.mxu0 0.0
  %230 = vmatpush1.msra.mxu0 0.0
  %231 = vmatprep.subr.mxu0 0.0
  %232 = vmatpush1.msra.mxu0 0.0
  %233 = vmatprep.subr.mxu0 0.0
  %234 = vmatpush1.msra.mxu0 0.0
  %235 = vmatprep.subr.mxu0 0.0
  %236 = vmatpush1.msra.mxu0 0.0
  %237 = vmatprep.subr.mxu0 0.0
  %238 = vmatpush1.msra.mxu0 0.0
  %239 = vmatprep.subr.mxu0 0.0
  %240 = vmatpush1.msra.mxu0 0.0
  %241 = vmatprep.subr.mxu0 0.0
  %242 = vmatpush1.msra.mxu0 0.0
  %243 = vmatprep.subr.mxu0 0.0
  %244 = vmatpush1.msra.mxu0 0.0
  %245 = vmatprep.subr.mxu0 0.0
  %246 = vmatpush1.msra.mxu0 0.0
  %247 = vmatprep.subr.mxu0 0.0
  %248 = vmatpush1.msra.mxu0 0.0
  %249 = vmatprep.subr.mxu0 0.0
  %250 = vmatpush1.msra.mxu0 0.0
  %251 = vmatprep.subr.mxu0 0.0
  %252 = vmatpush1.msra.mxu0 0.0
  %253 = vmatprep.subr.mxu0 0.0
  %254 = vmatpush1.msra.mxu0 0.0
  %255 = vmatprep.subr.mxu0 0.0
  %256 = vmatpush1.msra.mxu0 0.0
  %257 = vmatprep.subr.mxu0 0.0
  %258 = vmatpush1.msra.mxu0 0.0
  %259 = vmatprep.subr.mxu0 0.0
  %260 = vmatpush1.msra.mxu0 0.0
  %261 = vmatprep.mubr.f32.mxu0 0.0
  %262 = vmatmul.mubr.f32.gmra.mrb[0].mxu0 %v195
  %v263 = vpop.f32.mrb[0].mxu0
  %v264 = vadd.f32 0.0, %v263
  %v265 = vpop.f32.mrb[0].mxu0
  %266 = vdwg.mxu0
  %v267 = vadd.f32 %v189, %v264
  %v268 = vxor.u32 %v267, 2147483648
  %v269 = vmul.f32 %v268, 1.442695
  %v270 = vpow.pop %v269
  %v271 = vadd.f32 %v270, 1.0
  %v272 = vrcp.pop %v271
  %v273 = vmul.f32 1.0, %v272
  %v274 = vtanh.pop %v267
  %276 = vrot.lane.b32.xlu0 %v188, 32
  %v277 = vpop.permute.xlu0 %276
  %v279 = vmul.f32 %v273, %v277
  %281 = vrot.lane.b32.xlu0 %v274, 32
  %v282 = vpop.permute.xlu0 %281
  %v284 = vmul.f32 %v273, %v282
  %286 = vrot.lane.b32.xlu0 %v284, 32
  %v287 = vpop.permute.xlu0 %286
  %v289 = vadd.f32 %v279, %v287
  %v290 = vtanh.pop %v289
  %292 = vrot.lane.b32.xlu0 %v290, 32
  %v293 = vpop.permute.xlu0 %292
  %v295 = vmul.f32 %v273, %v293
  %s296 = scalar_lea.vmem [#allocation2], 8
  %v297 = vld [vmem:[%s296] sm:$0xff]
  %299 = vrot.lane.b32.xlu0 %v295, 64
  %v300 = vpop.permute.xlu0 %299
  %v301 = vsel %vm49, %v300, 0
  %303 = vmatprep.subr.mxu0 0.0
  %304 = vmatpush1.msra.mxu0 %v190
  %305 = vmatprep.subr.mxu0 0.0
  %306 = vmatpush1.msra.mxu0 %v191
  %307 = vmatprep.subr.mxu0 0.0
  %308 = vmatpush1.msra.mxu0 %v192
  %309 = vmatprep.subr.mxu0 0.0
  %310 = vmatpush1.msra.mxu0 %v193
  %311 = vmatprep.subr.mxu0 0.0
  %312 = vmatpush1.msra.mxu0 0.0
  %313 = vmatprep.subr.mxu0 0.0
  %314 = vmatpush1.msra.mxu0 0.0
  %315 = vmatprep.subr.mxu0 0.0
  %316 = vmatpush1.msra.mxu0 0.0
  %317 = vmatprep.subr.mxu0 0.0
  %318 = vmatpush1.msra.mxu0 0.0
  %319 = vmatprep.subr.mxu0 0.0
  %320 = vmatpush1.msra.mxu0 0.0
  %321 = vmatprep.subr.mxu0 0.0
  %322 = vmatpush1.msra.mxu0 0.0
  %323 = vmatprep.subr.mxu0 0.0
  %324 = vmatpush1.msra.mxu0 0.0
  %325 = vmatprep.subr.mxu0 0.0
  %326 = vmatpush1.msra.mxu0 0.0
  %327 = vmatprep.subr.mxu0 0.0
  %328 = vmatpush1.msra.mxu0 0.0
  %329 = vmatprep.subr.mxu0 0.0
  %330 = vmatpush1.msra.mxu0 0.0
  %331 = vmatprep.subr.mxu0 0.0
  %332 = vmatpush1.msra.mxu0 0.0
  %333 = vmatprep.subr.mxu0 0.0
  %334 = vmatpush1.msra.mxu0 0.0
  %335 = vmatprep.subr.mxu0 0.0
  %336 = vmatpush1.msra.mxu0 0.0
  %337 = vmatprep.subr.mxu0 0.0
  %338 = vmatpush1.msra.mxu0 0.0
  %339 = vmatprep.subr.mxu0 0.0
  %340 = vmatpush1.msra.mxu0 0.0
  %341 = vmatprep.subr.mxu0 0.0
  %342 = vmatpush1.msra.mxu0 0.0
  %343 = vmatprep.subr.mxu0 0.0
  %344 = vmatpush1.msra.mxu0 0.0
  %345 = vmatprep.subr.mxu0 0.0
  %346 = vmatpush1.msra.mxu0 0.0
  %347 = vmatprep.subr.mxu0 0.0
  %348 = vmatpush1.msra.mxu0 0.0
  %349 = vmatprep.subr.mxu0 0.0
  %350 = vmatpush1.msra.mxu0 0.0
  %351 = vmatprep.subr.mxu0 0.0
  %352 = vmatpush1.msra.mxu0 0.0
  %353 = vmatprep.subr.mxu0 0.0
  %354 = vmatpush1.msra.mxu0 0.0
  %355 = vmatprep.subr.mxu0 0.0
  %356 = vmatpush1.msra.mxu0 0.0
  %357 = vmatprep.subr.mxu0 0.0
  %358 = vmatpush1.msra.mxu0 0.0
  %359 = vmatprep.subr.mxu0 0.0
  %360 = vmatpush1.msra.mxu0 0.0
  %361 = vmatprep.subr.mxu0 0.0
  %362 = vmatpush1.msra.mxu0 0.0
  %363 = vmatprep.subr.mxu0 0.0
  %364 = vmatpush1.msra.mxu0 0.0
  %365 = vmatprep.subr.mxu0 0.0
  %366 = vmatpush1.msra.mxu0 0.0
  %367 = vmatprep.mubr.f32.mxu0 0.0
  %368 = vmatmul.mubr.f32.gmra.mrb[0].mxu0 %v301
  %v369 = vpop.f32.mrb[0].mxu0
  %v370 = vadd.f32 0.0, %v369
  %v371 = vpop.f32.mrb[0].mxu0
  %372 = vdwg.mxu0
  %v373 = vadd.f32 %v297, %v370
  %v374 = vxor.u32 %v373, 2147483648
  %v375 = vmul.f32 %v374, 1.442695
  %v376 = vpow.pop %v375
  %v377 = vadd.f32 %v376, 1.0
  %v378 = vrcp.pop %v377
  %v379 = vmul.f32 1.0, %v378
  %v380 = vtanh.pop %v373
  %v381 = vmul.f32 %v379, %v289
  %383 = vrot.lane.b32.xlu0 %v380, 32
  %v384 = vpop.permute.xlu0 %383
  %v386 = vmul.f32 %v379, %v384
  %388 = vrot.lane.b32.xlu0 %v386, 32
  %v389 = vpop.permute.xlu0 %388
  %v391 = vadd.f32 %v381, %v389
  %v392 = vtanh.pop %v391
  %394 = vrot.lane.b32.xlu0 %v392, 32
  %v395 = vpop.permute.xlu0 %394
  %v397 = vmul.f32 %v379, %v395
  %s398 = scalar_lea.vmem [#allocation2], 16
  %v399 = vld [vmem:[%s398] sm:$0xff]
  %401 = vrot.lane.b32.xlu0 %v397, 64
  %v402 = vpop.permute.xlu0 %401
  %v403 = vsel %vm49, %v402, 0
  %405 = vmatprep.subr.mxu0 0.0
  %406 = vmatpush1.msra.mxu0 %v190
  %407 = vmatprep.subr.mxu0 0.0
  %408 = vmatpush1.msra.mxu0 %v191
  %409 = vmatprep.subr.mxu0 0.0
  %410 = vmatpush1.msra.mxu0 %v192
  %411 = vmatprep.subr.mxu0 0.0
  %412 = vmatpush1.msra.mxu0 %v193
  %413 = vmatprep.subr.mxu0 0.0
  %414 = vmatpush1.msra.mxu0 0.0
  %415 = vmatprep.subr.mxu0 0.0
  %416 = vmatpush1.msra.mxu0 0.0
  %417 = vmatprep.subr.mxu0 0.0
  %418 = vmatpush1.msra.mxu0 0.0
  %419 = vmatprep.subr.mxu0 0.0
  %420 = vmatpush1.msra.mxu0 0.0
  %421 = vmatprep.subr.mxu0 0.0
  %422 = vmatpush1.msra.mxu0 0.0
  %423 = vmatprep.subr.mxu0 0.0
  %424 = vmatpush1.msra.mxu0 0.0
  %425 = vmatprep.subr.mxu0 0.0
  %426 = vmatpush1.msra.mxu0 0.0
  %427 = vmatprep.subr.mxu0 0.0
  %428 = vmatpush1.msra.mxu0 0.0
  %429 = vmatprep.subr.mxu0 0.0
  %430 = vmatpush1.msra.mxu0 0.0
  %431 = vmatprep.subr.mxu0 0.0
  %432 = vmatpush1.msra.mxu0 0.0
  %433 = vmatprep.subr.mxu0 0.0
  %434 = vmatpush1.msra.mxu0 0.0
  %435 = vmatprep.subr.mxu0 0.0
  %436 = vmatpush1.msra.mxu0 0.0
  %437 = vmatprep.subr.mxu0 0.0
  %438 = vmatpush1.msra.mxu0 0.0
  %439 = vmatprep.subr.mxu0 0.0
  %440 = vmatpush1.msra.mxu0 0.0
  %441 = vmatprep.subr.mxu0 0.0
  %442 = vmatpush1.msra.mxu0 0.0
  %443 = vmatprep.subr.mxu0 0.0
  %444 = vmatpush1.msra.mxu0 0.0
  %445 = vmatprep.subr.mxu0 0.0
  %446 = vmatpush1.msra.mxu0 0.0
  %447 = vmatprep.subr.mxu0 0.0
  %448 = vmatpush1.msra.mxu0 0.0
  %449 = vmatprep.subr.mxu0 0.0
  %450 = vmatpush1.msra.mxu0 0.0
  %451 = vmatprep.subr.mxu0 0.0
  %452 = vmatpush1.msra.mxu0 0.0
  %453 = vmatprep.subr.mxu0 0.0
  %454 = vmatpush1.msra.mxu0 0.0
  %455 = vmatprep.subr.mxu0 0.0
  %456 = vmatpush1.msra.mxu0 0.0
  %457 = vmatprep.subr.mxu0 0.0
  %458 = vmatpush1.msra.mxu0 0.0
  %459 = vmatprep.subr.mxu0 0.0
  %460 = vmatpush1.msra.mxu0 0.0
  %461 = vmatprep.subr.mxu0 0.0
  %462 = vmatpush1.msra.mxu0 0.0
  %463 = vmatprep.subr.mxu0 0.0
  %464 = vmatpush1.msra.mxu0 0.0
  %465 = vmatprep.subr.mxu0 0.0
  %466 = vmatpush1.msra.mxu0 0.0
  %467 = vmatprep.subr.mxu0 0.0
  %468 = vmatpush1.msra.mxu0 0.0
  %469 = vmatprep.mubr.f32.mxu0 0.0
  %470 = vmatmul.mubr.f32.gmra.mrb[0].mxu0 %v403
  %v471 = vpop.f32.mrb[0].mxu0
  %v472 = vadd.f32 0.0, %v471
  %v473 = vpop.f32.mrb[0].mxu0
  %474 = vdwg.mxu0
  %v475 = vadd.f32 %v399, %v472
  %v476 = vxor.u32 %v475, 2147483648
  %v477 = vmul.f32 %v476, 1.442695
  %v478 = vpow.pop %v477
  %v479 = vadd.f32 %v478, 1.0
  %v480 = vrcp.pop %v479
  %v481 = vmul.f32 1.0, %v480
  %v482 = vtanh.pop %v475
  %v483 = vmul.f32 %v481, %v391
  %485 = vrot.lane.b32.xlu0 %v482, 32
  %v486 = vpop.permute.xlu0 %485
  %v488 = vmul.f32 %v481, %v486
  %490 = vrot.lane.b32.xlu0 %v488, 32
  %v491 = vpop.permute.xlu0 %490
  %v493 = vadd.f32 %v483, %v491
  %v494 = vtanh.pop %v493
  %496 = vrot.lane.b32.xlu0 %v494, 32
  %v497 = vpop.permute.xlu0 %496
  %v499 = vmul.f32 %v481, %v497
  %s500 = scalar_lea.vmem [#allocation2], 24
  %v501 = vld [vmem:[%s500] sm:$0xff]
  %503 = vrot.lane.b32.xlu0 %v499, 64
  %v504 = vpop.permute.xlu0 %503
  %v505 = vsel %vm49, %v504, 0
  %507 = vmatprep.subr.mxu0 0.0
  %508 = vmatpush1.msra.mxu0 %v190
  %509 = vmatprep.subr.mxu0 0.0
  %510 = vmatpush1.msra.mxu0 %v191
  %511 = vmatprep.subr.mxu0 0.0
  %512 = vmatpush1.msra.mxu0 %v192
  %513 = vmatprep.subr.mxu0 0.0
  %514 = vmatpush1.msra.mxu0 %v193
  %515 = vmatprep.subr.mxu0 0.0
  %516 = vmatpush1.msra.mxu0 0.0
  %517 = vmatprep.subr.mxu0 0.0
  %518 = vmatpush1.msra.mxu0 0.0
  %519 = vmatprep.subr.mxu0 0.0
  %520 = vmatpush1.msra.mxu0 0.0
  %521 = vmatprep.subr.mxu0 0.0
  %522 = vmatpush1.msra.mxu0 0.0
  %523 = vmatprep.subr.mxu0 0.0
  %524 = vmatpush1.msra.mxu0 0.0
  %525 = vmatprep.subr.mxu0 0.0
  %526 = vmatpush1.msra.mxu0 0.0
  %527 = vmatprep.subr.mxu0 0.0
  %528 = vmatpush1.msra.mxu0 0.0
  %529 = vmatprep.subr.mxu0 0.0
  %530 = vmatpush1.msra.mxu0 0.0
  %531 = vmatprep.subr.mxu0 0.0
  %532 = vmatpush1.msra.mxu0 0.0
  %533 = vmatprep.subr.mxu0 0.0
  %534 = vmatpush1.msra.mxu0 0.0
  %535 = vmatprep.subr.mxu0 0.0
  %536 = vmatpush1.msra.mxu0 0.0
  %537 = vmatprep.subr.mxu0 0.0
  %538 = vmatpush1.msra.mxu0 0.0
  %539 = vmatprep.subr.mxu0 0.0
  %540 = vmatpush1.msra.mxu0 0.0
  %541 = vmatprep.subr.mxu0 0.0
  %542 = vmatpush1.msra.mxu0 0.0
  %543 = vmatprep.subr.mxu0 0.0
  %544 = vmatpush1.msra.mxu0 0.0
  %545 = vmatprep.subr.mxu0 0.0
  %546 = vmatpush1.msra.mxu0 0.0
  %547 = vmatprep.subr.mxu0 0.0
  %548 = vmatpush1.msra.mxu0 0.0
  %549 = vmatprep.subr.mxu0 0.0
  %550 = vmatpush1.msra.mxu0 0.0
  %551 = vmatprep.subr.mxu0 0.0
  %552 = vmatpush1.msra.mxu0 0.0
  %553 = vmatprep.subr.mxu0 0.0
  %554 = vmatpush1.msra.mxu0 0.0
  %555 = vmatprep.subr.mxu0 0.0
  %556 = vmatpush1.msra.mxu0 0.0
  %557 = vmatprep.subr.mxu0 0.0
  %558 = vmatpush1.msra.mxu0 0.0
  %559 = vmatprep.subr.mxu0 0.0
  %560 = vmatpush1.msra.mxu0 0.0
  %561 = vmatprep.subr.mxu0 0.0
  %562 = vmatpush1.msra.mxu0 0.0
  %563 = vmatprep.subr.mxu0 0.0
  %564 = vmatpush1.msra.mxu0 0.0
  %565 = vmatprep.subr.mxu0 0.0
  %566 = vmatpush1.msra.mxu0 0.0
  %567 = vmatprep.subr.mxu0 0.0
  %568 = vmatpush1.msra.mxu0 0.0
  %569 = vmatprep.subr.mxu0 0.0
  %570 = vmatpush1.msra.mxu0 0.0
  %571 = vmatprep.mubr.f32.mxu0 0.0
  %572 = vmatmul.mubr.f32.gmra.mrb[0].mxu0 %v505
  %v573 = vpop.f32.mrb[0].mxu0
  %v574 = vadd.f32 0.0, %v573
  %v575 = vpop.f32.mrb[0].mxu0
  %576 = vdwg.mxu0
  %v577 = vadd.f32 %v501, %v574
  %v578 = vxor.u32 %v577, 2147483648
  %v579 = vmul.f32 %v578, 1.442695
  %v580 = vpow.pop %v579
  %v581 = vadd.f32 %v580, 1.0
  %v582 = vrcp.pop %v581
  %v583 = vmul.f32 1.0, %v582
  %v584 = vtanh.pop %v577
  %v585 = vmul.f32 %v583, %v493
  %587 = vrot.lane.b32.xlu0 %v584, 32
  %v588 = vpop.permute.xlu0 %587
  %v590 = vmul.f32 %v583, %v588
  %592 = vrot.lane.b32.xlu0 %v590, 32
  %v593 = vpop.permute.xlu0 %592
  %v595 = vadd.f32 %v585, %v593
  %v596 = vtanh.pop %v595
  %598 = vrot.lane.b32.xlu0 %v596, 32
  %v599 = vpop.permute.xlu0 %598
  %v601 = vmul.f32 %v583, %v599
  %s602 = scalar_lea.vmem [#allocation2], 32
  %v603 = vld [vmem:[%s602] sm:$0xff]
  %605 = vrot.lane.b32.xlu0 %v601, 64
  %v606 = vpop.permute.xlu0 %605
  %v607 = vsel %vm49, %v606, 0
  %609 = vmatprep.subr.mxu0 0.0
  %610 = vmatpush1.msra.mxu0 %v190
  %611 = vmatprep.subr.mxu0 0.0
  %612 = vmatpush1.msra.mxu0 %v191
  %613 = vmatprep.subr.mxu0 0.0
  %614 = vmatpush1.msra.mxu0 %v192
  %615 = vmatprep.subr.mxu0 0.0
  %616 = vmatpush1.msra.mxu0 %v193
  %617 = vmatprep.subr.mxu0 0.0
  %618 = vmatpush1.msra.mxu0 0.0
  %619 = vmatprep.subr.mxu0 0.0
  %620 = vmatpush1.msra.mxu0 0.0
  %621 = vmatprep.subr.mxu0 0.0
  %622 = vmatpush1.msra.mxu0 0.0
  %623 = vmatprep.subr.mxu0 0.0
  %624 = vmatpush1.msra.mxu0 0.0
  %625 = vmatprep.subr.mxu0 0.0
  %626 = vmatpush1.msra.mxu0 0.0
  %627 = vmatprep.subr.mxu0 0.0
  %628 = vmatpush1.msra.mxu0 0.0
  %629 = vmatprep.subr.mxu0 0.0
  %630 = vmatpush1.msra.mxu0 0.0
  %631 = vmatprep.subr.mxu0 0.0
  %632 = vmatpush1.msra.mxu0 0.0
  %633 = vmatprep.subr.mxu0 0.0
  %634 = vmatpush1.msra.mxu0 0.0
  %635 = vmatprep.subr.mxu0 0.0
  %636 = vmatpush1.msra.mxu0 0.0
  %637 = vmatprep.subr.mxu0 0.0
  %638 = vmatpush1.msra.mxu0 0.0
  %639 = vmatprep.subr.mxu0 0.0
  %640 = vmatpush1.msra.mxu0 0.0
  %641 = vmatprep.subr.mxu0 0.0
  %642 = vmatpush1.msra.mxu0 0.0
  %643 = vmatprep.subr.mxu0 0.0
  %644 = vmatpush1.msra.mxu0 0.0
  %645 = vmatprep.subr.mxu0 0.0
  %646 = vmatpush1.msra.mxu0 0.0
  %647 = vmatprep.subr.mxu0 0.0
  %648 = vmatpush1.msra.mxu0 0.0
  %649 = vmatprep.subr.mxu0 0.0
  %650 = vmatpush1.msra.mxu0 0.0
  %651 = vmatprep.subr.mxu0 0.0
  %652 = vmatpush1.msra.mxu0 0.0
  %653 = vmatprep.subr.mxu0 0.0
  %654 = vmatpush1.msra.mxu0 0.0
  %655 = vmatprep.subr.mxu0 0.0
  %656 = vmatpush1.msra.mxu0 0.0
  %657 = vmatprep.subr.mxu0 0.0
  %658 = vmatpush1.msra.mxu0 0.0
  %659 = vmatprep.subr.mxu0 0.0
  %660 = vmatpush1.msra.mxu0 0.0
  %661 = vmatprep.subr.mxu0 0.0
  %662 = vmatpush1.msra.mxu0 0.0
  %663 = vmatprep.subr.mxu0 0.0
  %664 = vmatpush1.msra.mxu0 0.0
  %665 = vmatprep.subr.mxu0 0.0
  %666 = vmatpush1.msra.mxu0 0.0
  %667 = vmatprep.subr.mxu0 0.0
  %668 = vmatpush1.msra.mxu0 0.0
  %669 = vmatprep.subr.mxu0 0.0
  %670 = vmatpush1.msra.mxu0 0.0
  %671 = vmatprep.subr.mxu0 0.0
  %672 = vmatpush1.msra.mxu0 0.0
  %673 = vmatprep.mubr.f32.mxu0 0.0
  %674 = vmatmul.mubr.f32.gmra.mrb[0].mxu0 %v607
  %v675 = vpop.f32.mrb[0].mxu0
  %v676 = vadd.f32 0.0, %v675
  %v677 = vpop.f32.mrb[0].mxu0
  %678 = vdwg.mxu0
  %v679 = vadd.f32 %v603, %v676
  %v680 = vxor.u32 %v679, 2147483648
  %v681 = vmul.f32 %v680, 1.442695
  %v682 = vpow.pop %v681
  %v683 = vadd.f32 %v682, 1.0
  %v684 = vrcp.pop %v683
  %v685 = vmul.f32 1.0, %v684
  %v686 = vtanh.pop %v679
  %v687 = vmul.f32 %v685, %v595
  %689 = vrot.lane.b32.xlu0 %v686, 32
  %v690 = vpop.permute.xlu0 %689
  %v692 = vmul.f32 %v685, %v690
  %694 = vrot.lane.b32.xlu0 %v692, 32
  %v695 = vpop.permute.xlu0 %694
  %v697 = vadd.f32 %v687, %v695
  %v698 = vtanh.pop %v697
  %700 = vrot.lane.b32.xlu0 %v698, 32
  %v701 = vpop.permute.xlu0 %700
  %v703 = vmul.f32 %v685, %v701
  %s704 = scalar_lea.vmem [#allocation2], 40
  %v705 = vld [vmem:[%s704] sm:$0xff]
  %707 = vrot.lane.b32.xlu0 %v703, 64
  %v708 = vpop.permute.xlu0 %707
  %v709 = vsel %vm49, %v708, 0
  %711 = vmatprep.subr.mxu0 0.0
  %712 = vmatpush1.msra.mxu0 %v190
  %713 = vmatprep.subr.mxu0 0.0
  %714 = vmatpush1.msra.mxu0 %v191
  %715 = vmatprep.subr.mxu0 0.0
  %716 = vmatpush1.msra.mxu0 %v192
  %717 = vmatprep.subr.mxu0 0.0
  %718 = vmatpush1.msra.mxu0 %v193
  %719 = vmatprep.subr.mxu0 0.0
  %720 = vmatpush1.msra.mxu0 0.0
  %721 = vmatprep.subr.mxu0 0.0
  %722 = vmatpush1.msra.mxu0 0.0
  %723 = vmatprep.subr.mxu0 0.0
  %724 = vmatpush1.msra.mxu0 0.0
  %725 = vmatprep.subr.mxu0 0.0
  %726 = vmatpush1.msra.mxu0 0.0
  %727 = vmatprep.subr.mxu0 0.0
  %728 = vmatpush1.msra.mxu0 0.0
  %729 = vmatprep.subr.mxu0 0.0
  %730 = vmatpush1.msra.mxu0 0.0
  %731 = vmatprep.subr.mxu0 0.0
  %732 = vmatpush1.msra.mxu0 0.0
  %733 = vmatprep.subr.mxu0 0.0
  %734 = vmatpush1.msra.mxu0 0.0
  %735 = vmatprep.subr.mxu0 0.0
  %736 = vmatpush1.msra.mxu0 0.0
  %737 = vmatprep.subr.mxu0 0.0
  %738 = vmatpush1.msra.mxu0 0.0
  %739 = vmatprep.subr.mxu0 0.0
  %740 = vmatpush1.msra.mxu0 0.0
  %741 = vmatprep.subr.mxu0 0.0
  %742 = vmatpush1.msra.mxu0 0.0
  %743 = vmatprep.subr.mxu0 0.0
  %744 = vmatpush1.msra.mxu0 0.0
  %745 = vmatprep.subr.mxu0 0.0
  %746 = vmatpush1.msra.mxu0 0.0
  %747 = vmatprep.subr.mxu0 0.0
  %748 = vmatpush1.msra.mxu0 0.0
  %749 = vmatprep.subr.mxu0 0.0
  %750 = vmatpush1.msra.mxu0 0.0
  %751 = vmatprep.subr.mxu0 0.0
  %752 = vmatpush1.msra.mxu0 0.0
  %753 = vmatprep.subr.mxu0 0.0
  %754 = vmatpush1.msra.mxu0 0.0
  %755 = vmatprep.subr.mxu0 0.0
  %756 = vmatpush1.msra.mxu0 0.0
  %757 = vmatprep.subr.mxu0 0.0
  %758 = vmatpush1.msra.mxu0 0.0
  %759 = vmatprep.subr.mxu0 0.0
  %760 = vmatpush1.msra.mxu0 0.0
  %761 = vmatprep.subr.mxu0 0.0
  %762 = vmatpush1.msra.mxu0 0.0
  %763 = vmatprep.subr.mxu0 0.0
  %764 = vmatpush1.msra.mxu0 0.0
  %765 = vmatprep.subr.mxu0 0.0
  %766 = vmatpush1.msra.mxu0 0.0
  %767 = vmatprep.subr.mxu0 0.0
  %768 = vmatpush1.msra.mxu0 0.0
  %769 = vmatprep.subr.mxu0 0.0
  %770 = vmatpush1.msra.mxu0 0.0
  %771 = vmatprep.subr.mxu0 0.0
  %772 = vmatpush1.msra.mxu0 0.0
  %773 = vmatprep.subr.mxu0 0.0
  %774 = vmatpush1.msra.mxu0 0.0
  %775 = vmatprep.mubr.f32.mxu0 0.0
  %776 = vmatmul.mubr.f32.gmra.mrb[0].mxu0 %v709
  %v777 = vpop.f32.mrb[0].mxu0
  %v778 = vadd.f32 0.0, %v777
  %v779 = vpop.f32.mrb[0].mxu0
  %780 = vdwg.mxu0
  %v781 = vadd.f32 %v705, %v778
  %v782 = vxor.u32 %v781, 2147483648
  %v783 = vmul.f32 %v782, 1.442695
  %v784 = vpow.pop %v783
  %v785 = vadd.f32 %v784, 1.0
  %v786 = vrcp.pop %v785
  %v787 = vmul.f32 1.0, %v786
  %v788 = vtanh.pop %v781
  %v789 = vmul.f32 %v787, %v697
  %791 = vrot.lane.b32.xlu0 %v788, 32
  %v792 = vpop.permute.xlu0 %791
  %v794 = vmul.f32 %v787, %v792
  %796 = vrot.lane.b32.xlu0 %v794, 32
  %v797 = vpop.permute.xlu0 %796
  %v799 = vadd.f32 %v789, %v797
  %v800 = vtanh.pop %v799
  %802 = vrot.lane.b32.xlu0 %v800, 32
  %v803 = vpop.permute.xlu0 %802
  %v805 = vmul.f32 %v787, %v803
  %s806 = scalar_lea.vmem [#allocation2], 48
  %v807 = vld [vmem:[%s806] sm:$0xff]
  %809 = vrot.lane.b32.xlu0 %v805, 64
  %v810 = vpop.permute.xlu0 %809
  %v811 = vsel %vm49, %v810, 0
  %813 = vmatprep.subr.mxu0 0.0
  %814 = vmatpush1.msra.mxu0 %v190
  %815 = vmatprep.subr.mxu0 0.0
  %816 = vmatpush1.msra.mxu0 %v191
  %817 = vmatprep.subr.mxu0 0.0
  %818 = vmatpush1.msra.mxu0 %v192
  %819 = vmatprep.subr.mxu0 0.0
  %820 = vmatpush1.msra.mxu0 %v193
  %821 = vmatprep.subr.mxu0 0.0
  %822 = vmatpush1.msra.mxu0 0.0
  %823 = vmatprep.subr.mxu0 0.0
  %824 = vmatpush1.msra.mxu0 0.0
  %825 = vmatprep.subr.mxu0 0.0
  %826 = vmatpush1.msra.mxu0 0.0
  %827 = vmatprep.subr.mxu0 0.0
  %828 = vmatpush1.msra.mxu0 0.0
  %829 = vmatprep.subr.mxu0 0.0
  %830 = vmatpush1.msra.mxu0 0.0
  %831 = vmatprep.subr.mxu0 0.0
  %832 = vmatpush1.msra.mxu0 0.0
  %833 = vmatprep.subr.mxu0 0.0
  %834 = vmatpush1.msra.mxu0 0.0
  %835 = vmatprep.subr.mxu0 0.0
  %836 = vmatpush1.msra.mxu0 0.0
  %837 = vmatprep.subr.mxu0 0.0
  %838 = vmatpush1.msra.mxu0 0.0
  %839 = vmatprep.subr.mxu0 0.0
  %840 = vmatpush1.msra.mxu0 0.0
  %841 = vmatprep.subr.mxu0 0.0
  %842 = vmatpush1.msra.mxu0 0.0
  %843 = vmatprep.subr.mxu0 0.0
  %844 = vmatpush1.msra.mxu0 0.0
  %845 = vmatprep.subr.mxu0 0.0
  %846 = vmatpush1.msra.mxu0 0.0
  %847 = vmatprep.subr.mxu0 0.0
  %848 = vmatpush1.msra.mxu0 0.0
  %849 = vmatprep.subr.mxu0 0.0
  %850 = vmatpush1.msra.mxu0 0.0
  %851 = vmatprep.subr.mxu0 0.0
  %852 = vmatpush1.msra.mxu0 0.0
  %853 = vmatprep.subr.mxu0 0.0
  %854 = vmatpush1.msra.mxu0 0.0
  %855 = vmatprep.subr.mxu0 0.0
  %856 = vmatpush1.msra.mxu0 0.0
  %857 = vmatprep.subr.mxu0 0.0
  %858 = vmatpush1.msra.mxu0 0.0
  %859 = vmatprep.subr.mxu0 0.0
  %860 = vmatpush1.msra.mxu0 0.0
  %861 = vmatprep.subr.mxu0 0.0
  %862 = vmatpush1.msra.mxu0 0.0
  %863 = vmatprep.subr.mxu0 0.0
  %864 = vmatpush1.msra.mxu0 0.0
  %865 = vmatprep.subr.mxu0 0.0
  %866 = vmatpush1.msra.mxu0 0.0
  %867 = vmatprep.subr.mxu0 0.0
  %868 = vmatpush1.msra.mxu0 0.0
  %869 = vmatprep.subr.mxu0 0.0
  %870 = vmatpush1.msra.mxu0 0.0
  %871 = vmatprep.subr.mxu0 0.0
  %872 = vmatpush1.msra.mxu0 0.0
  %873 = vmatprep.subr.mxu0 0.0
  %874 = vmatpush1.msra.mxu0 0.0
  %875 = vmatprep.subr.mxu0 0.0
  %876 = vmatpush1.msra.mxu0 0.0
  %877 = vmatprep.mubr.f32.mxu0 0.0
  %878 = vmatmul.mubr.f32.gmra.mrb[0].mxu0 %v811
  %v879 = vpop.f32.mrb[0].mxu0
  %v880 = vadd.f32 0.0, %v879
  %v881 = vpop.f32.mrb[0].mxu0
  %882 = vdwg.mxu0
  %v883 = vadd.f32 %v807, %v880
  %v884 = vxor.u32 %v883, 2147483648
  %v885 = vmul.f32 %v884, 1.442695
  %v886 = vpow.pop %v885
  %v887 = vadd.f32 %v886, 1.0
  %v888 = vrcp.pop %v887
  %v889 = vmul.f32 1.0, %v888
  %v890 = vtanh.pop %v883
  %v891 = vmul.f32 %v889, %v799
  %893 = vrot.lane.b32.xlu0 %v890, 32
  %v894 = vpop.permute.xlu0 %893
  %v896 = vmul.f32 %v889, %v894
  %898 = vrot.lane.b32.xlu0 %v896, 32
  %v899 = vpop.permute.xlu0 %898
  %v901 = vadd.f32 %v891, %v899
  %v902 = vtanh.pop %v901
  %904 = vrot.lane.b32.xlu0 %v902, 32
  %v905 = vpop.permute.xlu0 %904
  %v907 = vmul.f32 %v889, %v905
  %s908 = scalar_lea.vmem [#allocation2], 56
  %v909 = vld [vmem:[%s908] sm:$0xff]
  %911 = vrot.lane.b32.xlu0 %v907, 64
  %v912 = vpop.permute.xlu0 %911
  %v913 = vsel %vm49, %v912, 0
  %915 = vmatprep.subr.mxu0 0.0
  %916 = vmatpush1.msra.mxu0 %v190
  %917 = vmatprep.subr.mxu0 0.0
  %918 = vmatpush1.msra.mxu0 %v191
  %919 = vmatprep.subr.mxu0 0.0
  %920 = vmatpush1.msra.mxu0 %v192
  %921 = vmatprep.subr.mxu0 0.0
  %922 = vmatpush1.msra.mxu0 %v193
  %923 = vmatprep.subr.mxu0 0.0
  %924 = vmatpush1.msra.mxu0 0.0
  %925 = vmatprep.subr.mxu0 0.0
  %926 = vmatpush1.msra.mxu0 0.0
  %927 = vmatprep.subr.mxu0 0.0
  %928 = vmatpush1.msra.mxu0 0.0
  %929 = vmatprep.subr.mxu0 0.0
  %930 = vmatpush1.msra.mxu0 0.0
  %931 = vmatprep.subr.mxu0 0.0
  %932 = vmatpush1.msra.mxu0 0.0
  %933 = vmatprep.subr.mxu0 0.0
  %934 = vmatpush1.msra.mxu0 0.0
  %935 = vmatprep.subr.mxu0 0.0
  %936 = vmatpush1.msra.mxu0 0.0
  %937 = vmatprep.subr.mxu0 0.0
  %938 = vmatpush1.msra.mxu0 0.0
  %939 = vmatprep.subr.mxu0 0.0
  %940 = vmatpush1.msra.mxu0 0.0
  %941 = vmatprep.subr.mxu0 0.0
  %942 = vmatpush1.msra.mxu0 0.0
  %943 = vmatprep.subr.mxu0 0.0
  %944 = vmatpush1.msra.mxu0 0.0
  %945 = vmatprep.subr.mxu0 0.0
  %946 = vmatpush1.msra.mxu0 0.0
  %947 = vmatprep.subr.mxu0 0.0
  %948 = vmatpush1.msra.mxu0 0.0
  %949 = vmatprep.subr.mxu0 0.0
  %950 = vmatpush1.msra.mxu0 0.0
  %951 = vmatprep.subr.mxu0 0.0
  %952 = vmatpush1.msra.mxu0 0.0
  %953 = vmatprep.subr.mxu0 0.0
  %954 = vmatpush1.msra.mxu0 0.0
  %955 = vmatprep.subr.mxu0 0.0
  %956 = vmatpush1.msra.mxu0 0.0
  %957 = vmatprep.subr.mxu0 0.0
  %958 = vmatpush1.msra.mxu0 0.0
  %959 = vmatprep.subr.mxu0 0.0
  %960 = vmatpush1.msra.mxu0 0.0
  %961 = vmatprep.subr.mxu0 0.0
  %962 = vmatpush1.msra.mxu0 0.0
  %963 = vmatprep.subr.mxu0 0.0
  %964 = vmatpush1.msra.mxu0 0.0
  %965 = vmatprep.subr.mxu0 0.0
  %966 = vmatpush1.msra.mxu0 0.0
  %967 = vmatprep.subr.mxu0 0.0
  %968 = vmatpush1.msra.mxu0 0.0
  %969 = vmatprep.subr.mxu0 0.0
  %970 = vmatpush1.msra.mxu0 0.0
  %971 = vmatprep.subr.mxu0 0.0
  %972 = vmatpush1.msra.mxu0 0.0
  %973 = vmatprep.subr.mxu0 0.0
  %974 = vmatpush1.msra.mxu0 0.0
  %975 = vmatprep.subr.mxu0 0.0
  %976 = vmatpush1.msra.mxu0 0.0
  %977 = vmatprep.subr.mxu0 0.0
  %978 = vmatpush1.msra.mxu0 0.0
  %979 = vmatprep.mubr.f32.mxu0 0.0
  %980 = vmatmul.mubr.f32.gmra.mrb[0].mxu0 %v913
  %v981 = vpop.f32.mrb[0].mxu0
  %v982 = vadd.f32 0.0, %v981
  %v983 = vpop.f32.mrb[0].mxu0
  %984 = vdwg.mxu0
  %v985 = vadd.f32 %v909, %v982
  %v986 = vxor.u32 %v985, 2147483648
  %v987 = vmul.f32 %v986, 1.442695
  %v988 = vpow.pop %v987
  %v989 = vadd.f32 %v988, 1.0
  %v990 = vrcp.pop %v989
  %v991 = vmul.f32 1.0, %v990
  %v992 = vtanh.pop %v985
  %v993 = vmul.f32 %v991, %v901
  %995 = vrot.lane.b32.xlu0 %v992, 32
  %v996 = vpop.permute.xlu0 %995
  %v998 = vmul.f32 %v991, %v996
  %1000 = vrot.lane.b32.xlu0 %v998, 32
  %v1001 = vpop.permute.xlu0 %1000
  %v1003 = vadd.f32 %v993, %v1001
  %v1004 = vtanh.pop %v1003
  %1006 = vrot.lane.b32.xlu0 %v1004, 32
  %v1007 = vpop.permute.xlu0 %1006
  %v1009 = vmul.f32 %v991, %v1007
  %1011 = vrot.lane.b32.xlu0 %v1009, 64
  %v1012 = vpop.permute.xlu0 %1011
  %1014 = vst.msk [vmem:[#allocation3] sm:$0xff] %vm49, %v1012
  %1016 = vrot.lane.b32.xlu0 %v1003, 96
  %v1017 = vpop.permute.xlu0 %1016
  %1019 = vst.msk [vmem:[#allocation4] sm:$0xff] %vm49, %v1017
  // Predicated region
  $region30: #{toxic_text_classifier_forward.1} parent=0 // pred_check
    %p1020 = pneg %p23
  $region31: #{toxic_text_classifier_forward.1} parent=0 // pred_check_branch
    %1022 = sbr.rel (%p1020) target = $region33
  $region32: #{toxic_text_classifier_forward.1} parent=0 // pred_region
    %v1023 = vld [vmem:[%s4] sm:$0xff]
    %v1024 = vld [vmem:[%s4 + $0x8] sm:$0xff]
    %v1025 = vld [vmem:[%s4 + $0x10] sm:$0xff]
    %v1026 = vld [vmem:[%s4 + $0x18] sm:$0xff]
    %v1027 = vld [vmem:[%s5] sm:$0x1]
    %v1029 = vlaneseq
    %v1030 = vshrl.u32 %v1029, 7
    %v1031 = vsub.s32 0, %v1030
    %v1032 = vrot.slane %v1027, %v1031
    %v1034 = vsel %vm49, %v1012, 0
    %1036 = vmatprep.subr.mxu0 0.0
    %1037 = vmatpush1.msra.mxu0 %v1023
    %1038 = vmatprep.subr.mxu0 0.0
    %1039 = vmatpush1.msra.mxu0 %v1024
    %1040 = vmatprep.subr.mxu0 0.0
    %1041 = vmatpush1.msra.mxu0 %v1025
    %1042 = vmatprep.subr.mxu0 0.0
    %1043 = vmatpush1.msra.mxu0 %v1026
    %1044 = vmatprep.subr.mxu0 0.0
    %1045 = vmatpush1.msra.mxu0 0.0
    %1046 = vmatprep.subr.mxu0 0.0
    %1047 = vmatpush1.msra.mxu0 0.0
    %1048 = vmatprep.subr.mxu0 0.0
    %1049 = vmatpush1.msra.mxu0 0.0
    %1050 = vmatprep.subr.mxu0 0.0
    %1051 = vmatpush1.msra.mxu0 0.0
    %1052 = vmatprep.subr.mxu0 0.0
    %1053 = vmatpush1.msra.mxu0 0.0
    %1054 = vmatprep.subr.mxu0 0.0
    %1055 = vmatpush1.msra.mxu0 0.0
    %1056 = vmatprep.subr.mxu0 0.0
    %1057 = vmatpush1.msra.mxu0 0.0
    %1058 = vmatprep.subr.mxu0 0.0
    %1059 = vmatpush1.msra.mxu0 0.0
    %1060 = vmatprep.subr.mxu0 0.0
    %1061 = vmatpush1.msra.mxu0 0.0
    %1062 = vmatprep.subr.mxu0 0.0
    %1063 = vmatpush1.msra.mxu0 0.0
    %1064 = vmatprep.subr.mxu0 0.0
    %1065 = vmatpush1.msra.mxu0 0.0
    %1066 = vmatprep.subr.mxu0 0.0
    %1067 = vmatpush1.msra.mxu0 0.0
    %1068 = vmatprep.subr.mxu0 0.0
    %1069 = vmatpush1.msra.mxu0 0.0
    %1070 = vmatprep.subr.mxu0 0.0
    %1071 = vmatpush1.msra.mxu0 0.0
    %1072 = vmatprep.subr.mxu0 0.0
    %1073 = vmatpush1.msra.mxu0 0.0
    %1074 = vmatprep.subr.mxu0 0.0
    %1075 = vmatpush1.msra.mxu0 0.0
    %1076 = vmatprep.subr.mxu0 0.0
    %1077 = vmatpush1.msra.mxu0 0.0
    %1078 = vmatprep.subr.mxu0 0.0
    %1079 = vmatpush1.msra.mxu0 0.0
    %1080 = vmatprep.subr.mxu0 0.0
    %1081 = vmatpush1.msra.mxu0 0.0
    %1082 = vmatprep.subr.mxu0 0.0
    %1083 = vmatpush1.msra.mxu0 0.0
    %1084 = vmatprep.subr.mxu0 0.0
    %1085 = vmatpush1.msra.mxu0 0.0
    %1086 = vmatprep.subr.mxu0 0.0
    %1087 = vmatpush1.msra.mxu0 0.0
    %1088 = vmatprep.subr.mxu0 0.0
    %1089 = vmatpush1.msra.mxu0 0.0
    %1090 = vmatprep.subr.mxu0 0.0
    %1091 = vmatpush1.msra.mxu0 0.0
    %1092 = vmatprep.subr.mxu0 0.0
    %1093 = vmatpush1.msra.mxu0 0.0
    %1094 = vmatprep.subr.mxu0 0.0
    %1095 = vmatpush1.msra.mxu0 0.0
    %1096 = vmatprep.subr.mxu0 0.0
    %1097 = vmatpush1.msra.mxu0 0.0
    %1098 = vmatprep.subr.mxu0 0.0
    %1099 = vmatpush1.msra.mxu0 0.0
    %1100 = vmatprep.mubr.f32.mxu0 0.0
    %1101 = vmatmul.mubr.f32.gmra.mrb[0].mxu0 %v1034
    %v1102 = vpop.f32.mrb[0].mxu0
    %v1103 = vadd.f32 %v1032, %v1102
    %v1104 = vpop.f32.mrb[0].mxu0
    %1105 = vdwg.mxu0
    %vm1106 = vcmask 23552
    %1107 = vst.msk [vmem:[%s6] sm:$0xff] %vm1106, %v1103
  $region33: #{toxic_text_classifier_forward.1} parent=0 // pred_fallthru
    _
  // Predicated region
  $region34: #{toxic_text_classifier_forward.1} parent=0 // pred_check
    _
  $region35: #{toxic_text_classifier_forward.1} parent=0 // pred_check_branch
    %1109 = sbr.rel (0) target = $region37
  $region36: #{toxic_text_classifier_forward.1} parent=0 // pred_region
    _
  $region37: #{toxic_text_classifier_forward.1} parent=0 // pred_fallthru
    _
  // Predicated region
  $region38: #{toxic_text_classifier_forward.1} parent=0 // pred_check
    _
  $region39: #{toxic_text_classifier_forward.1} parent=0 // pred_check_branch
    %1111 = sbr.rel (0) target = $region41
  $region40: #{toxic_text_classifier_forward.1} parent=0 // pred_region
    _
  $region41: #{toxic_text_classifier_forward.1} parent=0 // pred_fallthru
    _

</llo_original>
